<compile_context>
chip_gen: v6e
topology: v6e:2x2x1
jax: 0.10.0
libtpu: 0.0.40
codegen_flags: <defaults>
</compile_context>

<pallas_src>
import math
import jax
import jax.numpy as jnp
from jax.experimental import pallas as pl
from jax.experimental.pallas import tpu as pltpu

# ----- model hyperparameters (small, consistent with the module) -----
BATCH = 2
SEQ = 8
D_MODEL = 32
HEADS = 4
D_K = 8
SCALE = 1.0 / math.sqrt(D_K)
HD = HEADS * D_K          # 32
N_ROWS = BATCH * SEQ      # 16
QKV_ROWS = 3 * N_ROWS     # 48
QKV_COLS = 3 * HD         # 96


def mha_kernel(xqkv_ref, wqkv_ref, bqkv_ref, wo_ref, bo_ref, o_ref, s_scr, x_scr):
    # ---- fused Q/K/V projection: one (48,32)@(32,96) MXU pass + one bias add ----
    proj = jnp.dot(xqkv_ref[...], wqkv_ref[...],
                   preferred_element_type=jnp.float32) + bqkv_ref[...]

    # Static row/lane slices pick the (activation, weight) diagonal blocks we need.
    # qp is already scaled by 1/sqrt(d_k) (folded into Wq/bq in the wrapper).
    qp = proj[0 * N_ROWS:1 * N_ROWS, 0 * HD:1 * HD].reshape(BATCH, SEQ, HD)
    kp = proj[1 * N_ROWS:2 * N_ROWS, 1 * HD:2 * HD].reshape(BATCH, SEQ, HD)
    vp = proj[2 * N_ROWS:3 * N_ROWS, 2 * HD:3 * HD].reshape(BATCH, SEQ, HD)

    # ---- scores per head (static lane slices, batched over B on the MXU),
    #      packed along lanes into scratch: s_scr[b, i, h*SEQ + j] ----
    for h in range(HEADS):
        sl = slice(h * D_K, (h + 1) * D_K)
        s_scr[:, :, h * SEQ:(h + 1) * SEQ] = jnp.einsum(
            'bid,bjd->bij', qp[:, :, sl], kp[:, :, sl],
            preferred_element_type=jnp.float32)

    # ---- merged softmax over the QUERY axis i (nn.Softmax(dim=1) on [b,i,j,h]):
    #      ONE max / exp / sum / reciprocal / mul pass for ALL heads ----
    s = s_scr[...]
    s = s - jnp.max(s, axis=1, keepdims=True)
    e = jnp.exp(s)
    attn = e * pl.reciprocal(jnp.sum(e, axis=1, keepdims=True), approx=True)
    # (eval-mode dropout is identity)

    # ---- attn @ V per head, packed into x_scr[b, i, h*D_K + d]
    #      (matches torch's x.reshape(batch, seq, heads*d_k) order) ----
    for h in range(HEADS):
        x_scr[:, :, h * D_K:(h + 1) * D_K] = jnp.einsum(
            'bij,bjd->bid',
            attn[:, :, h * SEQ:(h + 1) * SEQ],
            vp[:, :, h * D_K:(h + 1) * D_K],
            preferred_element_type=jnp.float32)

    # ---- single output-projection matmul + single full-block store ----
    o_ref[...] = jnp.dot(x_scr[...].reshape(N_ROWS, HD), wo_ref[...],
                         preferred_element_type=jnp.float32) + bo_ref[...]


def multi_head_attention(q, k, v, params):
    B, S, D = q.shape
    assert (B, S, D) == (BATCH, SEQ, D_MODEL)

    # Wrapper-side layout plumbing (free XLA ops, outside the kernel):
    #  - stack q/k/v along the sublane axis -> one activation tensor / one DMA,
    #  - fuse pre-transposed Wq/Wk/Wv into one (D, 3*HD) weight and one (1, 3*HD) bias,
    #  - fold the 1/sqrt(d_k) score scale into the Q projection weight + bias,
    #  - pre-transpose Wo to [in_features, out_features].
    xqkv = jnp.concatenate([q.reshape(N_ROWS, D),
                            k.reshape(N_ROWS, D),
                            v.reshape(N_ROWS, D)], axis=0)            # (48, 32)
    w_qkv = jnp.concatenate([params["wq"].T * SCALE,
                             params["wk"].T,
                             params["wv"].T], axis=1)                 # (32, 96)
    b_qkv = jnp.concatenate([params["bq"] * SCALE,
                             params["bk"],
                             params["bv"]], axis=1)                   # (1, 96)
    wo_t = params["wo"].T                                             # (32, 32)

    vmem_specs = [pl.BlockSpec(memory_space=pltpu.MemorySpace.VMEM) for _ in range(5)]
    out2 = pl.pallas_call(
        mha_kernel,
        out_shape=jax.ShapeDtypeStruct((N_ROWS, D), jnp.float32),
        in_specs=vmem_specs,
        out_specs=pl.BlockSpec(memory_space=pltpu.MemorySpace.VMEM),
        scratch_shapes=[pltpu.VMEM((BATCH, SEQ, HEADS * SEQ), jnp.float32),   # packed scores
                        pltpu.VMEM((BATCH, SEQ, HD), jnp.float32)],           # packed attn@V
    )(xqkv, w_qkv, b_qkv, wo_t, params["bo"])

    return out2.reshape(B, S, D)


def mha_reference(q, k, v, params):
    """Pure-JAX reference matching the PyTorch forward (mask=None, eval dropout)."""
    B, S, D = q.shape
    qp = (q @ params["wq"].T + params["bq"]).reshape(B, S, HEADS, D_K)
    kp = (k @ params["wk"].T + params["bk"]).reshape(B, S, HEADS, D_K)
    vp = (v @ params["wv"].T + params["bv"]).reshape(B, S, HEADS, D_K)
    scores = jnp.einsum('bihd,bjhd->bijh', qp, kp) * SCALE
    attn = jax.nn.softmax(scores, axis=1)   # dim=1 of [b,i,j,h] == query axis, as in the module
    x = jnp.einsum('bijh,bjhd->bihd', attn, vp).reshape(B, S, HD)
    return x @ params["wo"].T + params["bo"]


def init_params(key):
    ks = jax.random.split(key, 8)
    bound_in = 1.0 / math.sqrt(D_MODEL)
    bound_out = 1.0 / math.sqrt(HD)
    u = lambda k, shape, b: jax.random.uniform(k, shape, jnp.float32, -b, b)
    return {
        "wq": u(ks[0], (HD, D_MODEL), bound_in),
        "bq": u(ks[1], (1, HD), bound_in),          # bias=True chosen for q/k (module arg `bias`)
        "wk": u(ks[2], (HD, D_MODEL), bound_in),
        "bk": u(ks[3], (1, HD), bound_in),
        "wv": u(ks[4], (HD, D_MODEL), bound_in),
        "bv": u(ks[5], (1, HD), bound_in),          # value projection always has bias
        "wo": u(ks[6], (D_MODEL, HD), bound_out),
        "bo": u(ks[7], (1, D_MODEL), bound_out),
    }


if __name__ == "__main__":
    key = jax.random.PRNGKey(0)
    kq, kk, kv, kp = jax.random.split(key, 4)
    q = jax.random.normal(kq, (BATCH, SEQ, D_MODEL), jnp.float32)
    k = jax.random.normal(kk, (BATCH, SEQ, D_MODEL), jnp.float32)
    v = jax.random.normal(kv, (BATCH, SEQ, D_MODEL), jnp.float32)
    params = init_params(kp)

    out = multi_head_attention(q, k, v, params)
    out = jax.block_until_ready(out)

    ref = mha_reference(q, k, v, params)
    assert out.shape == (BATCH, SEQ, D_MODEL)
    # Tolerance loosened because the softmax denominator uses the approximate EUP reciprocal.
    assert jnp.allclose(out, ref, rtol=1e-2, atol=1e-2), "mismatch vs reference"

    print("KERNEL_OK")
</pallas_src>

<mosaic_0001>
module attributes {stable_mosaic.version = 11 : i64} {
  func.func @mha_kernel(%arg0: memref<48x32xf32, #tpu.memory_space<vmem>>, %arg1: memref<32x96xf32, #tpu.memory_space<vmem>>, %arg2: memref<1x96xf32, #tpu.memory_space<vmem>>, %arg3: memref<32x32xf32, #tpu.memory_space<vmem>>, %arg4: memref<1x32xf32, #tpu.memory_space<vmem>>, %arg5: memref<16x32xf32, #tpu.memory_space<vmem>>, %arg6: memref<2x8x32xf32, #tpu.memory_space<vmem>>, %arg7: memref<2x8x32xf32, #tpu.memory_space<vmem>>) attributes {dimension_semantics = [], scalar_prefetch = 0 : i64, scratch_operands = 2 : i64, tpu.core_type = #tpu.core_type<tc>} {
    %c0 = arith.constant 0 : index
    %c0_0 = arith.constant 0 : index
    %0 = vector.load %arg0[%c0, %c0_0] : memref<48x32xf32, #tpu.memory_space<vmem>>, vector<48x32xf32>
    %c0_1 = arith.constant 0 : index
    %c0_2 = arith.constant 0 : index
    %1 = vector.load %arg1[%c0_1, %c0_2] : memref<32x96xf32, #tpu.memory_space<vmem>>, vector<32x96xf32>
    %cst = arith.constant dense<0.000000e+00> : vector<48x96xf32>
    %2 = tpu.matmul %0, %1, %cst {dimension_numbers = #tpu.dot_dimension_numbers<[1], [0], [0], [1], [0, 0, 1, 1], [], []>} : vector<48x32xf32>, vector<32x96xf32>, vector<48x96xf32> -> vector<48x96xf32>
    %c0_3 = arith.constant 0 : index
    %c0_4 = arith.constant 0 : index
    %3 = vector.load %arg2[%c0_3, %c0_4] : memref<1x96xf32, #tpu.memory_space<vmem>>, vector<1x96xf32>
    %4 = vector.broadcast %3 : vector<1x96xf32> to vector<48x96xf32>
    %5 = arith.addf %2, %4 : vector<48x96xf32>
    %6 = vector.extract_strided_slice %5 {offsets = [0, 0], sizes = [16, 32], strides = [1, 1]} : vector<48x96xf32> to vector<16x32xf32>
    %7 = vector.shape_cast %6 : vector<16x32xf32> to vector<2x8x32xf32>
    %8 = vector.extract_strided_slice %5 {offsets = [16, 32], sizes = [16, 32], strides = [1, 1]} : vector<48x96xf32> to vector<16x32xf32>
    %9 = vector.shape_cast %8 : vector<16x32xf32> to vector<2x8x32xf32>
    %10 = vector.extract_strided_slice %5 {offsets = [32, 64], sizes = [16, 32], strides = [1, 1]} : vector<48x96xf32> to vector<16x32xf32>
    %11 = vector.shape_cast %10 : vector<16x32xf32> to vector<2x8x32xf32>
    %12 = vector.extract_strided_slice %7 {offsets = [0, 0, 0], sizes = [2, 8, 8], strides = [1, 1, 1]} : vector<2x8x32xf32> to vector<2x8x8xf32>
    %13 = vector.extract_strided_slice %9 {offsets = [0, 0, 0], sizes = [2, 8, 8], strides = [1, 1, 1]} : vector<2x8x32xf32> to vector<2x8x8xf32>
    "tpu.trace_start"() <{level = 10 : i32, message = "bid,bjd->bij"}> : () -> ()
    %cst_5 = arith.constant dense<0.000000e+00> : vector<2x8x8xf32>
    %14 = tpu.matmul %12, %13, %cst_5 {dimension_numbers = #tpu.dot_dimension_numbers<[2], [2], [1], [1], [0, 0, 0, 1, 1, 1], [0], [0]>} : vector<2x8x8xf32>, vector<2x8x8xf32>, vector<2x8x8xf32> -> vector<2x8x8xf32>
    "tpu.trace_stop"() : () -> ()
    %c0_6 = arith.constant 0 : index
    %c0_7 = arith.constant 0 : index
    %c0_8 = arith.constant 0 : index
    %15 = vector.load %arg6[%c0_6, %c0_7, %c0_8] : memref<2x8x32xf32, #tpu.memory_space<vmem>>, vector<2x8x8xf32>
    tpu.vector_store %arg6[%c0_6, %c0_7, %c0_8], %14 {strides = array<i32>} : memref<2x8x32xf32, #tpu.memory_space<vmem>>, vector<2x8x8xf32>,
    %16 = vector.extract_strided_slice %7 {offsets = [0, 0, 8], sizes = [2, 8, 8], strides = [1, 1, 1]} : vector<2x8x32xf32> to vector<2x8x8xf32>
    %17 = vector.extract_strided_slice %9 {offsets = [0, 0, 8], sizes = [2, 8, 8], strides = [1, 1, 1]} : vector<2x8x32xf32> to vector<2x8x8xf32>
    "tpu.trace_start"() <{level = 10 : i32, message = "bid,bjd->bij"}> : () -> ()
    %cst_9 = arith.constant dense<0.000000e+00> : vector<2x8x8xf32>
    %18 = tpu.matmul %16, %17, %cst_9 {dimension_numbers = #tpu.dot_dimension_numbers<[2], [2], [1], [1], [0, 0, 0, 1, 1, 1], [0], [0]>} : vector<2x8x8xf32>, vector<2x8x8xf32>, vector<2x8x8xf32> -> vector<2x8x8xf32>
    "tpu.trace_stop"() : () -> ()
    %c0_10 = arith.constant 0 : index
    %c0_11 = arith.constant 0 : index
    %c8 = arith.constant 8 : index
    %19 = vector.load %arg6[%c0_10, %c0_11, %c8] : memref<2x8x32xf32, #tpu.memory_space<vmem>>, vector<2x8x8xf32>
    tpu.vector_store %arg6[%c0_10, %c0_11, %c8], %18 {strides = array<i32>} : memref<2x8x32xf32, #tpu.memory_space<vmem>>, vector<2x8x8xf32>,
    %20 = vector.extract_strided_slice %7 {offsets = [0, 0, 16], sizes = [2, 8, 8], strides = [1, 1, 1]} : vector<2x8x32xf32> to vector<2x8x8xf32>
    %21 = vector.extract_strided_slice %9 {offsets = [0, 0, 16], sizes = [2, 8, 8], strides = [1, 1, 1]} : vector<2x8x32xf32> to vector<2x8x8xf32>
    "tpu.trace_start"() <{level = 10 : i32, message = "bid,bjd->bij"}> : () -> ()
    %cst_12 = arith.constant dense<0.000000e+00> : vector<2x8x8xf32>
    %22 = tpu.matmul %20, %21, %cst_12 {dimension_numbers = #tpu.dot_dimension_numbers<[2], [2], [1], [1], [0, 0, 0, 1, 1, 1], [0], [0]>} : vector<2x8x8xf32>, vector<2x8x8xf32>, vector<2x8x8xf32> -> vector<2x8x8xf32>
    "tpu.trace_stop"() : () -> ()
    %c0_13 = arith.constant 0 : index
    %c0_14 = arith.constant 0 : index
    %c16 = arith.constant 16 : index
    %23 = vector.load %arg6[%c0_13, %c0_14, %c16] : memref<2x8x32xf32, #tpu.memory_space<vmem>>, vector<2x8x8xf32>
    tpu.vector_store %arg6[%c0_13, %c0_14, %c16], %22 {strides = array<i32>} : memref<2x8x32xf32, #tpu.memory_space<vmem>>, vector<2x8x8xf32>,
    %24 = vector.extract_strided_slice %7 {offsets = [0, 0, 24], sizes = [2, 8, 8], strides = [1, 1, 1]} : vector<2x8x32xf32> to vector<2x8x8xf32>
    %25 = vector.extract_strided_slice %9 {offsets = [0, 0, 24], sizes = [2, 8, 8], strides = [1, 1, 1]} : vector<2x8x32xf32> to vector<2x8x8xf32>
    "tpu.trace_start"() <{level = 10 : i32, message = "bid,bjd->bij"}> : () -> ()
    %cst_15 = arith.constant dense<0.000000e+00> : vector<2x8x8xf32>
    %26 = tpu.matmul %24, %25, %cst_15 {dimension_numbers = #tpu.dot_dimension_numbers<[2], [2], [1], [1], [0, 0, 0, 1, 1, 1], [0], [0]>} : vector<2x8x8xf32>, vector<2x8x8xf32>, vector<2x8x8xf32> -> vector<2x8x8xf32>
    "tpu.trace_stop"() : () -> ()
    %c0_16 = arith.constant 0 : index
    %c0_17 = arith.constant 0 : index
    %c24 = arith.constant 24 : index
    %27 = vector.load %arg6[%c0_16, %c0_17, %c24] : memref<2x8x32xf32, #tpu.memory_space<vmem>>, vector<2x8x8xf32>
    tpu.vector_store %arg6[%c0_16, %c0_17, %c24], %26 {strides = array<i32>} : memref<2x8x32xf32, #tpu.memory_space<vmem>>, vector<2x8x8xf32>,
    %c0_18 = arith.constant 0 : index
    %c0_19 = arith.constant 0 : index
    %c0_20 = arith.constant 0 : index
    %28 = vector.load %arg6[%c0_18, %c0_19, %c0_20] : memref<2x8x32xf32, #tpu.memory_space<vmem>>, vector<2x8x32xf32>
    %cst_21 = arith.constant dense<0xFF800000> : vector<2x32xf32>
    %29 = vector.multi_reduction <maximumf>, %28, %cst_21 [1] : vector<2x8x32xf32> to vector<2x32xf32>
    %30 = vector.shape_cast %29 : vector<2x32xf32> to vector<2x1x32xf32>
    %31 = vector.broadcast %30 : vector<2x1x32xf32> to vector<2x8x32xf32>
    %32 = arith.subf %28, %31 : vector<2x8x32xf32>
    %33 = math.exp %32 : vector<2x8x32xf32>
    %cst_22 = arith.constant dense<0.000000e+00> : vector<2x32xf32>
    %34 = vector.multi_reduction <add>, %33, %cst_22 [1] : vector<2x8x32xf32> to vector<2x32xf32>
    %35 = vector.shape_cast %34 : vector<2x32xf32> to vector<2x1x32xf32>
    %36 = tpu.reciprocal %35 {approx = true} : vector<2x1x32xf32> -> vector<2x1x32xf32>
    %37 = vector.broadcast %36 : vector<2x1x32xf32> to vector<2x8x32xf32>
    %38 = arith.mulf %33, %37 : vector<2x8x32xf32>
    %39 = vector.extract_strided_slice %38 {offsets = [0, 0, 0], sizes = [2, 8, 8], strides = [1, 1, 1]} : vector<2x8x32xf32> to vector<2x8x8xf32>
    %40 = vector.extract_strided_slice %11 {offsets = [0, 0, 0], sizes = [2, 8, 8], strides = [1, 1, 1]} : vector<2x8x32xf32> to vector<2x8x8xf32>
    "tpu.trace_start"() <{level = 10 : i32, message = "bij,bjd->bid"}> : () -> ()
    %cst_23 = arith.constant dense<0.000000e+00> : vector<2x8x8xf32>
    %41 = tpu.matmul %39, %40, %cst_23 {dimension_numbers = #tpu.dot_dimension_numbers<[2], [1], [1], [2], [0, 0, 0, 1, 1, 2], [0], [0]>} : vector<2x8x8xf32>, vector<2x8x8xf32>, vector<2x8x8xf32> -> vector<2x8x8xf32>
    "tpu.trace_stop"() : () -> ()
    %c0_24 = arith.constant 0 : index
    %c0_25 = arith.constant 0 : index
    %c0_26 = arith.constant 0 : index
    %42 = vector.load %arg7[%c0_24, %c0_25, %c0_26] : memref<2x8x32xf32, #tpu.memory_space<vmem>>, vector<2x8x8xf32>
    tpu.vector_store %arg7[%c0_24, %c0_25, %c0_26], %41 {strides = array<i32>} : memref<2x8x32xf32, #tpu.memory_space<vmem>>, vector<2x8x8xf32>,
    %43 = vector.extract_strided_slice %38 {offsets = [0, 0, 8], sizes = [2, 8, 8], strides = [1, 1, 1]} : vector<2x8x32xf32> to vector<2x8x8xf32>
    %44 = vector.extract_strided_slice %11 {offsets = [0, 0, 8], sizes = [2, 8, 8], strides = [1, 1, 1]} : vector<2x8x32xf32> to vector<2x8x8xf32>
    "tpu.trace_start"() <{level = 10 : i32, message = "bij,bjd->bid"}> : () -> ()
    %cst_27 = arith.constant dense<0.000000e+00> : vector<2x8x8xf32>
    %45 = tpu.matmul %43, %44, %cst_27 {dimension_numbers = #tpu.dot_dimension_numbers<[2], [1], [1], [2], [0, 0, 0, 1, 1, 2], [0], [0]>} : vector<2x8x8xf32>, vector<2x8x8xf32>, vector<2x8x8xf32> -> vector<2x8x8xf32>
    "tpu.trace_stop"() : () -> ()
    %c0_28 = arith.constant 0 : index
    %c0_29 = arith.constant 0 : index
    %c8_30 = arith.constant 8 : index
    %46 = vector.load %arg7[%c0_28, %c0_29, %c8_30] : memref<2x8x32xf32, #tpu.memory_space<vmem>>, vector<2x8x8xf32>
    tpu.vector_store %arg7[%c0_28, %c0_29, %c8_30], %45 {strides = array<i32>} : memref<2x8x32xf32, #tpu.memory_space<vmem>>, vector<2x8x8xf32>,
    %47 = vector.extract_strided_slice %38 {offsets = [0, 0, 16], sizes = [2, 8, 8], strides = [1, 1, 1]} : vector<2x8x32xf32> to vector<2x8x8xf32>
    %48 = vector.extract_strided_slice %11 {offsets = [0, 0, 16], sizes = [2, 8, 8], strides = [1, 1, 1]} : vector<2x8x32xf32> to vector<2x8x8xf32>
    "tpu.trace_start"() <{level = 10 : i32, message = "bij,bjd->bid"}> : () -> ()
    %cst_31 = arith.constant dense<0.000000e+00> : vector<2x8x8xf32>
    %49 = tpu.matmul %47, %48, %cst_31 {dimension_numbers = #tpu.dot_dimension_numbers<[2], [1], [1], [2], [0, 0, 0, 1, 1, 2], [0], [0]>} : vector<2x8x8xf32>, vector<2x8x8xf32>, vector<2x8x8xf32> -> vector<2x8x8xf32>
    "tpu.trace_stop"() : () -> ()
    %c0_32 = arith.constant 0 : index
    %c0_33 = arith.constant 0 : index
    %c16_34 = arith.constant 16 : index
    %50 = vector.load %arg7[%c0_32, %c0_33, %c16_34] : memref<2x8x32xf32, #tpu.memory_space<vmem>>, vector<2x8x8xf32>
    tpu.vector_store %arg7[%c0_32, %c0_33, %c16_34], %49 {strides = array<i32>} : memref<2x8x32xf32, #tpu.memory_space<vmem>>, vector<2x8x8xf32>,
    %51 = vector.extract_strided_slice %38 {offsets = [0, 0, 24], sizes = [2, 8, 8], strides = [1, 1, 1]} : vector<2x8x32xf32> to vector<2x8x8xf32>
    %52 = vector.extract_strided_slice %11 {offsets = [0, 0, 24], sizes = [2, 8, 8], strides = [1, 1, 1]} : vector<2x8x32xf32> to vector<2x8x8xf32>
    "tpu.trace_start"() <{level = 10 : i32, message = "bij,bjd->bid"}> : () -> ()
    %cst_35 = arith.constant dense<0.000000e+00> : vector<2x8x8xf32>
    %53 = tpu.matmul %51, %52, %cst_35 {dimension_numbers = #tpu.dot_dimension_numbers<[2], [1], [1], [2], [0, 0, 0, 1, 1, 2], [0], [0]>} : vector<2x8x8xf32>, vector<2x8x8xf32>, vector<2x8x8xf32> -> vector<2x8x8xf32>
    "tpu.trace_stop"() : () -> ()
    %c0_36 = arith.constant 0 : index
    %c0_37 = arith.constant 0 : index
    %c24_38 = arith.constant 24 : index
    %54 = vector.load %arg7[%c0_36, %c0_37, %c24_38] : memref<2x8x32xf32, #tpu.memory_space<vmem>>, vector<2x8x8xf32>
    tpu.vector_store %arg7[%c0_36, %c0_37, %c24_38], %53 {strides = array<i32>} : memref<2x8x32xf32, #tpu.memory_space<vmem>>, vector<2x8x8xf32>,
    %c0_39 = arith.constant 0 : index
    %c0_40 = arith.constant 0 : index
    %c0_41 = arith.constant 0 : index
    %55 = vector.load %arg7[%c0_39, %c0_40, %c0_41] : memref<2x8x32xf32, #tpu.memory_space<vmem>>, vector<2x8x32xf32>
    %56 = vector.shape_cast %55 : vector<2x8x32xf32> to vector<16x32xf32>
    %c0_42 = arith.constant 0 : index
    %c0_43 = arith.constant 0 : index
    %57 = vector.load %arg3[%c0_42, %c0_43] : memref<32x32xf32, #tpu.memory_space<vmem>>, vector<32x32xf32>
    %cst_44 = arith.constant dense<0.000000e+00> : vector<16x32xf32>
    %58 = tpu.matmul %56, %57, %cst_44 {dimension_numbers = #tpu.dot_dimension_numbers<[1], [0], [0], [1], [0, 0, 1, 1], [], []>} : vector<16x32xf32>, vector<32x32xf32>, vector<16x32xf32> -> vector<16x32xf32>
    %c0_45 = arith.constant 0 : index
    %c0_46 = arith.constant 0 : index
    %59 = vector.load %arg4[%c0_45, %c0_46] : memref<1x32xf32, #tpu.memory_space<vmem>>, vector<1x32xf32>
    %60 = vector.broadcast %59 : vector<1x32xf32> to vector<16x32xf32>
    %61 = arith.addf %58, %60 : vector<16x32xf32>
    %c0_47 = arith.constant 0 : index
    %c0_48 = arith.constant 0 : index
    %62 = vector.load %arg5[%c0_47, %c0_48] : memref<16x32xf32, #tpu.memory_space<vmem>>, vector<16x32xf32>
    tpu.vector_store %arg5[%c0_47, %c0_48], %61 {strides = array<i32>} : memref<16x32xf32, #tpu.memory_space<vmem>>, vector<16x32xf32>,
    return
  }
}

</mosaic_0001>

<llo_original>
// kernel: tpu_custom_call.1
$region0: #{tpu_custom_call.1}
  #allocation0 [shape = 'u32[]', space=smem, size = 0x4, offset = 0x4, fixed_abs, tag = 'smem constant byte address 0x4 - core index']
  #allocation1 [shape = 'u32[144,128]{1,0:T(1,128)}', space=vmem, size = 0x12000, scoped, tag = 'internal scratch']
  #allocation2 [shape = 'f32[2,8,32]{2,1,0:T(8,128)}', space=vmem, size = 0x2000, scoped, tag = 'scratch operand']
  #allocation3 [shape = 'f32[2,8,32]{2,1,0:T(8,128)}', space=vmem, size = 0x2000, scoped, tag = 'scratch operand']
  %s0 = inlined_call_operand.vmem [shape: f32[48,32], index: 0, kind: input, shape index: {}]
  %s1 = inlined_call_operand.vmem [shape: f32[32,96], index: 1, kind: input, shape index: {}]
  %s2 = inlined_call_operand.vmem [shape: f32[1,96], index: 2, kind: input, shape index: {}]
  %s3 = inlined_call_operand.vmem [shape: f32[32,32], index: 3, kind: input, shape index: {}]
  %s4 = inlined_call_operand.vmem [shape: f32[1,32], index: 4, kind: input, shape index: {}]
  %s5 = inlined_call_operand.hbm [shape: f32[16,32], index: 5, kind: output, shape index: {}]
  %s6 = sld [smem:[#allocation0]]
  $region30: #{tpu_custom_call.1} parent=0
    _
  %s8 = ssub.s32 1, %s6
  %s9 = scalar_select 0, %s8, %s6
  $region1: #{tpu_custom_call.1} parent=0
    #allocation4 [shape = 'u8[8192]{0}', space=vmem, size = 0x2000, scoped, tag = 'output window, operand 0, single buffered']
    #allocation5 [shape = 's32[1]{0}', space=sflag, size = 0x4, scoped, tag = 'scoped memory for tpu_custom_call.1']
    %10 = vsyncpa [#allocation5], 0
    // Predicated region
    $region2: #{tpu_custom_call.1} parent=1 // pred_check
      _
    $region3: #{tpu_custom_call.1} parent=1 // pred_check_branch
      %12 = sbr.rel (0) target = $region5
    $region4: #{tpu_custom_call.1} parent=1 // pred_region
      _
    $region5: #{tpu_custom_call.1} parent=1 // pred_fallthru
      _
    // Predicated region
    $region6: #{tpu_custom_call.1} parent=1 // pred_check
      _
    $region7: #{tpu_custom_call.1} parent=1 // pred_check_branch
      %14 = sbr.rel (0) target = $region9
    $region8: #{tpu_custom_call.1} parent=1 // pred_region
      _
    $region9: #{tpu_custom_call.1} parent=1 // pred_fallthru
      _
    // Predicated region
    $region10: #{tpu_custom_call.1} parent=1 // pred_check
      _
    $region11: #{tpu_custom_call.1} parent=1 // pred_check_branch
      %16 = sbr.rel (0) target = $region13
    $region12: #{tpu_custom_call.1} parent=1 // pred_region
      _
    $region13: #{tpu_custom_call.1} parent=1 // pred_fallthru
      _
    // Predicated region
    $region14: #{tpu_custom_call.1} parent=1 // pred_check
      _
    $region15: #{tpu_custom_call.1} parent=1 // pred_check_branch
      %18 = sbr.rel (0) target = $region17
    $region16: #{tpu_custom_call.1} parent=1 // pred_region
      _
    $region17: #{tpu_custom_call.1} parent=1 // pred_fallthru
      _
    // Predicated region
    $region18: #{tpu_custom_call.1} parent=1 // pred_check
      _
    $region19: #{tpu_custom_call.1} parent=1 // pred_check_branch
      %20 = sbr.rel (0) target = $region21
    $region20: #{tpu_custom_call.1} parent=1 // pred_region
      _
    $region21: #{tpu_custom_call.1} parent=1 // pred_fallthru
      _
    %v21 = vld [vmem:[%s0] sm:$0xff]
    %v22 = vld [vmem:[%s0 + $0x8] sm:$0xff]
    %v23 = vld [vmem:[%s0 + $0x10] sm:$0xff]
    %v24 = vld [vmem:[%s0 + $0x18] sm:$0xff]
    %v25 = vld [vmem:[%s0 + $0x20] sm:$0xff]
    %v26 = vld [vmem:[%s0 + $0x28] sm:$0xff]
    %v27 = vld [vmem:[%s1] sm:$0xff]
    %v28 = vld [vmem:[%s1 + $0x8] sm:$0xff]
    %v29 = vld [vmem:[%s1 + $0x10] sm:$0xff]
    %v30 = vld [vmem:[%s1 + $0x18] sm:$0xff]
    %v31 = vld [vmem:[%s2] sm:$0x1]
    %v33 = vlaneseq
    %v34 = vshrl.u32 %v33, 7
    %v35 = vsub.s32 0, %v34
    %v36 = vrot.slane %v31, %v35
    %vm38 = vcmask 261120
    %v40 = vsel %vm38, %v21, 0
    %v43 = vsel %vm38, %v22, 0
    %v46 = vsel %vm38, %v23, 0
    %v49 = vsel %vm38, %v24, 0
    %v52 = vsel %vm38, %v25, 0
    %v55 = vsel %vm38, %v26, 0
    %57 = vmatprep.subr.mxu0 0.0
    %58 = vmatpush1.msra.mxu0 0.0
    %59 = vmatprep.subr.mxu0 0.0
    %60 = vmatpush1.msra.mxu0 0.0
    %61 = vmatprep.subr.mxu0 0.0
    %62 = vmatpush1.msra.mxu0 0.0
    %63 = vmatprep.subr.mxu0 0.0
    %64 = vmatpush1.msra.mxu0 0.0
    %65 = vmatprep.subr.mxu0 0.0
    %66 = vmatpush1.msra.mxu0 0.0
    %67 = vmatprep.subr.mxu0 0.0
    %68 = vmatpush1.msra.mxu0 0.0
    %69 = vmatprep.subr.mxu0 0.0
    %70 = vmatpush1.msra.mxu0 0.0
    %71 = vmatprep.subr.mxu0 0.0
    %72 = vmatpush1.msra.mxu0 0.0
    %73 = vmatprep.subr.mxu0 0.0
    %74 = vmatpush1.msra.mxu0 0.0
    %75 = vmatprep.subr.mxu0 0.0
    %76 = vmatpush1.msra.mxu0 0.0
    %77 = vmatprep.subr.mxu0 0.0
    %78 = vmatpush1.msra.mxu0 0.0
    %79 = vmatprep.subr.mxu0 0.0
    %80 = vmatpush1.msra.mxu0 0.0
    %81 = vmatprep.subr.mxu0 0.0
    %82 = vmatpush1.msra.mxu0 %v30
    %83 = vmatprep.subr.mxu0 0.0
    %84 = vmatpush1.msra.mxu0 %v29
    %85 = vmatprep.subr.mxu0 0.0
    %86 = vmatpush1.msra.mxu0 %v28
    %87 = vmatprep.subr.mxu0 0.0
    %88 = vmatpush1.msra.mxu0 %v27
    %89 = vmatprep.subr.mxu0 0.0
    %90 = vmatpush2.msra.mxu0 0.0
    %91 = vmatprep.subr.mxu0 0.0
    %92 = vmatpush2.msra.mxu0 0.0
    %93 = vmatprep.subr.mxu0 0.0
    %94 = vmatpush2.msra.mxu0 0.0
    %95 = vmatprep.subr.mxu0 0.0
    %96 = vmatpush2.msra.mxu0 0.0
    %97 = vmatprep.subr.mxu0 0.0
    %98 = vmatpush2.msra.mxu0 0.0
    %99 = vmatprep.subr.mxu0 0.0
    %100 = vmatpush2.msra.mxu0 0.0
    %101 = vmatprep.subr.mxu0 0.0
    %102 = vmatpush2.msra.mxu0 0.0
    %103 = vmatprep.subr.mxu0 0.0
    %104 = vmatpush2.msra.mxu0 0.0
    %105 = vmatprep.subr.mxu0 0.0
    %106 = vmatpush2.msra.mxu0 0.0
    %107 = vmatprep.subr.mxu0 0.0
    %108 = vmatpush2.msra.mxu0 0.0
    %109 = vmatprep.subr.mxu0 0.0
    %110 = vmatpush2.msra.mxu0 0.0
    %111 = vmatprep.subr.mxu0 0.0
    %112 = vmatpush2.msra.mxu0 0.0
    %113 = vmatprep.subr.mxu0 0.0
    %114 = vmatpush2.msra.mxu0 0.0
    %115 = vmatprep.subr.mxu0 0.0
    %116 = vmatpush2.msra.mxu0 0.0
    %117 = vmatprep.subr.mxu0 0.0
    %118 = vmatpush2.msra.mxu0 0.0
    %119 = vmatprep.subr.mxu0 0.0
    %120 = vmatpush2.msra.mxu0 0.0
    %121 = vmatprep.mubr.f32.mxu0 0.0
    %122 = vmatmul.mubr.f32.gmra.mxu0 %v40
    %v123 = vpop.f32.mrf.mxu0
    %v124 = vadd.f32 %v36, %v123
    %v125 = vpop.f32.mrf.mxu0
    %126 = vmatprep.mubr.f32.mxu0 0.0
    %127 = vmatmul.mubr.f32.gmra.mxu0 %v43
    %v128 = vpop.f32.mrf.mxu0
    %v129 = vadd.f32 %v36, %v128
    %v130 = vpop.f32.mrf.mxu0
    %131 = vmatprep.mubr.f32.mxu0 0.0
    %132 = vmatmul.mubr.f32.gmra.mxu0 %v46
    %v133 = vpop.f32.mrf.mxu0
    %v134 = vadd.f32 %v36, %v133
    %v135 = vpop.f32.mrf.mxu0
    %136 = vmatprep.mubr.f32.mxu0 0.0
    %137 = vmatmul.mubr.f32.gmra.mxu0 %v49
    %v138 = vpop.f32.mrf.mxu0
    %v139 = vadd.f32 %v36, %v138
    %v140 = vpop.f32.mrf.mxu0
    %141 = vmatprep.mubr.f32.mxu0 0.0
    %142 = vmatmul.mubr.f32.gmra.mxu0 %v52
    %v143 = vpop.f32.mrf.mxu0
    %v144 = vadd.f32 %v36, %v143
    %v145 = vpop.f32.mrf.mxu0
    %146 = vmatprep.mubr.f32.mxu0 0.0
    %147 = vmatmul.mubr.f32.gmra.mxu0 %v55
    %v148 = vpop.f32.mrf.mxu0
    %v149 = vadd.f32 %v36, %v148
    %v150 = vpop.f32.mrf.mxu0
    %151 = vdwg.mxu0
    %153 = vrot.lane.b32.xlu0 %v134, 96
    %v154 = vpop.permute.xlu0 %153
    %vm155 = vcmask 64512
    %v157 = vsel %vm155, %v124, 0
    %v159 = vsel %vm155, %v154, 0
    %161 = vmatprep.subr.mxu0 0.0
    %162 = vmatpush1.xpose.msra.mxu0 0.0
    %163 = vmatprep.subr.mxu0 0.0
    %164 = vmatpush1.xpose.msra.mxu0 0.0
    %165 = vmatprep.subr.mxu0 0.0
    %166 = vmatpush1.xpose.msra.mxu0 0.0
    %167 = vmatprep.subr.mxu0 0.0
    %168 = vmatpush1.xpose.msra.mxu0 0.0
    %169 = vmatprep.subr.mxu0 0.0
    %170 = vmatpush1.xpose.msra.mxu0 0.0
    %171 = vmatprep.subr.mxu0 0.0
    %172 = vmatpush1.xpose.msra.mxu0 0.0
    %173 = vmatprep.subr.mxu0 0.0
    %174 = vmatpush1.xpose.msra.mxu0 0.0
    %175 = vmatprep.subr.mxu0 0.0
    %176 = vmatpush1.xpose.msra.mxu0 0.0
    %177 = vmatprep.subr.mxu0 0.0
    %178 = vmatpush1.xpose.msra.mxu0 0.0
    %179 = vmatprep.subr.mxu0 0.0
    %180 = vmatpush1.xpose.msra.mxu0 0.0
    %181 = vmatprep.subr.mxu0 0.0
    %182 = vmatpush1.xpose.msra.mxu0 0.0
    %183 = vmatprep.subr.mxu0 0.0
    %184 = vmatpush1.xpose.msra.mxu0 0.0
    %185 = vmatprep.subr.mxu0 0.0
    %186 = vmatpush1.xpose.msra.mxu0 0.0
    %187 = vmatprep.subr.mxu0 0.0
    %188 = vmatpush1.xpose.msra.mxu0 0.0
    %189 = vmatprep.subr.mxu0 0.0
    %190 = vmatpush1.xpose.msra.mxu0 0.0
    %191 = vmatprep.subr.mxu0 0.0
    %192 = vmatpush1.xpose.msra.mxu0 %v159
    %193 = vmatprep.subr.mxu0 0.0
    %194 = vmatpush2.xpose.msra.mxu0 0.0
    %195 = vmatprep.subr.mxu0 0.0
    %196 = vmatpush2.xpose.msra.mxu0 0.0
    %197 = vmatprep.subr.mxu0 0.0
    %198 = vmatpush2.xpose.msra.mxu0 0.0
    %199 = vmatprep.subr.mxu0 0.0
    %200 = vmatpush2.xpose.msra.mxu0 0.0
    %201 = vmatprep.subr.mxu0 0.0
    %202 = vmatpush2.xpose.msra.mxu0 0.0
    %203 = vmatprep.subr.mxu0 0.0
    %204 = vmatpush2.xpose.msra.mxu0 0.0
    %205 = vmatprep.subr.mxu0 0.0
    %206 = vmatpush2.xpose.msra.mxu0 0.0
    %207 = vmatprep.subr.mxu0 0.0
    %208 = vmatpush2.xpose.msra.mxu0 0.0
    %209 = vmatprep.subr.mxu0 0.0
    %210 = vmatpush2.xpose.msra.mxu0 0.0
    %211 = vmatprep.subr.mxu0 0.0
    %212 = vmatpush2.xpose.msra.mxu0 0.0
    %213 = vmatprep.subr.mxu0 0.0
    %214 = vmatpush2.xpose.msra.mxu0 0.0
    %215 = vmatprep.subr.mxu0 0.0
    %216 = vmatpush2.xpose.msra.mxu0 0.0
    %217 = vmatprep.subr.mxu0 0.0
    %218 = vmatpush2.xpose.msra.mxu0 0.0
    %219 = vmatprep.subr.mxu0 0.0
    %220 = vmatpush2.xpose.msra.mxu0 0.0
    %221 = vmatprep.subr.mxu0 0.0
    %222 = vmatpush2.xpose.msra.mxu0 0.0
    %223 = vmatprep.subr.mxu0 0.0
    %224 = vmatpush2.xpose.msra.mxu0 0.0
    %225 = vmatprep.mubr.f32.mxu0 0.0
    %226 = vmatmul.mubr.f32.gmra.mxu0 %v157
    %v227 = vpop.f32.mrf.mxu0
    %v228 = vadd.f32 0.0, %v227
    %v229 = vpop.f32.mrf.mxu0
    %230 = vdwg.mxu0
    %232 = vrot.lane.b32.xlu0 %v139, 96
    %v233 = vpop.permute.xlu0 %232
    %v235 = vsel %vm155, %v129, 0
    %v237 = vsel %vm155, %v233, 0
    %239 = vmatprep.subr.mxu0 0.0
    %240 = vmatpush1.xpose.msra.mxu0 0.0
    %241 = vmatprep.subr.mxu0 0.0
    %242 = vmatpush1.xpose.msra.mxu0 0.0
    %243 = vmatprep.subr.mxu0 0.0
    %244 = vmatpush1.xpose.msra.mxu0 0.0
    %245 = vmatprep.subr.mxu0 0.0
    %246 = vmatpush1.xpose.msra.mxu0 0.0
    %247 = vmatprep.subr.mxu0 0.0
    %248 = vmatpush1.xpose.msra.mxu0 0.0
    %249 = vmatprep.subr.mxu0 0.0
    %250 = vmatpush1.xpose.msra.mxu0 0.0
    %251 = vmatprep.subr.mxu0 0.0
    %252 = vmatpush1.xpose.msra.mxu0 0.0
    %253 = vmatprep.subr.mxu0 0.0
    %254 = vmatpush1.xpose.msra.mxu0 0.0
    %255 = vmatprep.subr.mxu0 0.0
    %256 = vmatpush1.xpose.msra.mxu0 0.0
    %257 = vmatprep.subr.mxu0 0.0
    %258 = vmatpush1.xpose.msra.mxu0 0.0
    %259 = vmatprep.subr.mxu0 0.0
    %260 = vmatpush1.xpose.msra.mxu0 0.0
    %261 = vmatprep.subr.mxu0 0.0
    %262 = vmatpush1.xpose.msra.mxu0 0.0
    %263 = vmatprep.subr.mxu0 0.0
    %264 = vmatpush1.xpose.msra.mxu0 0.0
    %265 = vmatprep.subr.mxu0 0.0
    %266 = vmatpush1.xpose.msra.mxu0 0.0
    %267 = vmatprep.subr.mxu0 0.0
    %268 = vmatpush1.xpose.msra.mxu0 0.0
    %269 = vmatprep.subr.mxu0 0.0
    %270 = vmatpush1.xpose.msra.mxu0 %v237
    %271 = vmatprep.subr.mxu0 0.0
    %272 = vmatpush2.xpose.msra.mxu0 0.0
    %273 = vmatprep.subr.mxu0 0.0
    %274 = vmatpush2.xpose.msra.mxu0 0.0
    %275 = vmatprep.subr.mxu0 0.0
    %276 = vmatpush2.xpose.msra.mxu0 0.0
    %277 = vmatprep.subr.mxu0 0.0
    %278 = vmatpush2.xpose.msra.mxu0 0.0
    %279 = vmatprep.subr.mxu0 0.0
    %280 = vmatpush2.xpose.msra.mxu0 0.0
    %281 = vmatprep.subr.mxu0 0.0
    %282 = vmatpush2.xpose.msra.mxu0 0.0
    %283 = vmatprep.subr.mxu0 0.0
    %284 = vmatpush2.xpose.msra.mxu0 0.0
    %285 = vmatprep.subr.mxu0 0.0
    %286 = vmatpush2.xpose.msra.mxu0 0.0
    %287 = vmatprep.subr.mxu0 0.0
    %288 = vmatpush2.xpose.msra.mxu0 0.0
    %289 = vmatprep.subr.mxu0 0.0
    %290 = vmatpush2.xpose.msra.mxu0 0.0
    %291 = vmatprep.subr.mxu0 0.0
    %292 = vmatpush2.xpose.msra.mxu0 0.0
    %293 = vmatprep.subr.mxu0 0.0
    %294 = vmatpush2.xpose.msra.mxu0 0.0
    %295 = vmatprep.subr.mxu0 0.0
    %296 = vmatpush2.xpose.msra.mxu0 0.0
    %297 = vmatprep.subr.mxu0 0.0
    %298 = vmatpush2.xpose.msra.mxu0 0.0
    %299 = vmatprep.subr.mxu0 0.0
    %300 = vmatpush2.xpose.msra.mxu0 0.0
    %301 = vmatprep.subr.mxu0 0.0
    %302 = vmatpush2.xpose.msra.mxu0 0.0
    %303 = vmatprep.mubr.f32.mxu0 0.0
    %304 = vmatmul.mubr.f32.gmra.mxu0 %v235
    %v305 = vpop.f32.mrf.mxu0
    %v306 = vadd.f32 0.0, %v305
    %v307 = vpop.f32.mrf.mxu0
    %308 = vdwg.mxu0
    %309 = vst.msk [vmem:[#allocation2] sm:$0xff] %vm155, %v228
    %310 = vst.msk [vmem:[#allocation2 + $0x8] sm:$0xff] %vm155, %v306
    %311 = vrot.lane.b32.xlu0 %v124, 120
    %v312 = vpop.permute.xlu0 %311
    %313 = vrot.lane.b32.xlu0 %v134, 88
    %v314 = vpop.permute.xlu0 %313
    %v315 = vsel %vm155, %v312, 0
    %v317 = vsel %vm155, %v314, 0
    %319 = vmatprep.subr.mxu0 0.0
    %320 = vmatpush1.xpose.msra.mxu0 0.0
    %321 = vmatprep.subr.mxu0 0.0
    %322 = vmatpush1.xpose.msra.mxu0 0.0
    %323 = vmatprep.subr.mxu0 0.0
    %324 = vmatpush1.xpose.msra.mxu0 0.0
    %325 = vmatprep.subr.mxu0 0.0
    %326 = vmatpush1.xpose.msra.mxu0 0.0
    %327 = vmatprep.subr.mxu0 0.0
    %328 = vmatpush1.xpose.msra.mxu0 0.0
    %329 = vmatprep.subr.mxu0 0.0
    %330 = vmatpush1.xpose.msra.mxu0 0.0
    %331 = vmatprep.subr.mxu0 0.0
    %332 = vmatpush1.xpose.msra.mxu0 0.0
    %333 = vmatprep.subr.mxu0 0.0
    %334 = vmatpush1.xpose.msra.mxu0 0.0
    %335 = vmatprep.subr.mxu0 0.0
    %336 = vmatpush1.xpose.msra.mxu0 0.0
    %337 = vmatprep.subr.mxu0 0.0
    %338 = vmatpush1.xpose.msra.mxu0 0.0
    %339 = vmatprep.subr.mxu0 0.0
    %340 = vmatpush1.xpose.msra.mxu0 0.0
    %341 = vmatprep.subr.mxu0 0.0
    %342 = vmatpush1.xpose.msra.mxu0 0.0
    %343 = vmatprep.subr.mxu0 0.0
    %344 = vmatpush1.xpose.msra.mxu0 0.0
    %345 = vmatprep.subr.mxu0 0.0
    %346 = vmatpush1.xpose.msra.mxu0 0.0
    %347 = vmatprep.subr.mxu0 0.0
    %348 = vmatpush1.xpose.msra.mxu0 0.0
    %349 = vmatprep.subr.mxu0 0.0
    %350 = vmatpush1.xpose.msra.mxu0 %v317
    %351 = vmatprep.subr.mxu0 0.0
    %352 = vmatpush2.xpose.msra.mxu0 0.0
    %353 = vmatprep.subr.mxu0 0.0
    %354 = vmatpush2.xpose.msra.mxu0 0.0
    %355 = vmatprep.subr.mxu0 0.0
    %356 = vmatpush2.xpose.msra.mxu0 0.0
    %357 = vmatprep.subr.mxu0 0.0
    %358 = vmatpush2.xpose.msra.mxu0 0.0
    %359 = vmatprep.subr.mxu0 0.0
    %360 = vmatpush2.xpose.msra.mxu0 0.0
    %361 = vmatprep.subr.mxu0 0.0
    %362 = vmatpush2.xpose.msra.mxu0 0.0
    %363 = vmatprep.subr.mxu0 0.0
    %364 = vmatpush2.xpose.msra.mxu0 0.0
    %365 = vmatprep.subr.mxu0 0.0
    %366 = vmatpush2.xpose.msra.mxu0 0.0
    %367 = vmatprep.subr.mxu0 0.0
    %368 = vmatpush2.xpose.msra.mxu0 0.0
    %369 = vmatprep.subr.mxu0 0.0
    %370 = vmatpush2.xpose.msra.mxu0 0.0
    %371 = vmatprep.subr.mxu0 0.0
    %372 = vmatpush2.xpose.msra.mxu0 0.0
    %373 = vmatprep.subr.mxu0 0.0
    %374 = vmatpush2.xpose.msra.mxu0 0.0
    %375 = vmatprep.subr.mxu0 0.0
    %376 = vmatpush2.xpose.msra.mxu0 0.0
    %377 = vmatprep.subr.mxu0 0.0
    %378 = vmatpush2.xpose.msra.mxu0 0.0
    %379 = vmatprep.subr.mxu0 0.0
    %380 = vmatpush2.xpose.msra.mxu0 0.0
    %381 = vmatprep.subr.mxu0 0.0
    %382 = vmatpush2.xpose.msra.mxu0 0.0
    %383 = vmatprep.mubr.f32.mxu0 0.0
    %384 = vmatmul.mubr.f32.gmra.mxu0 %v315
    %v385 = vpop.f32.mrf.mxu0
    %v386 = vadd.f32 0.0, %v385
    %v387 = vpop.f32.mrf.mxu0
    %388 = vdwg.mxu0
    %389 = vrot.lane.b32.xlu0 %v129, 120
    %v390 = vpop.permute.xlu0 %389
    %391 = vrot.lane.b32.xlu0 %v139, 88
    %v392 = vpop.permute.xlu0 %391
    %v393 = vsel %vm155, %v390, 0
    %v395 = vsel %vm155, %v392, 0
    %397 = vmatprep.subr.mxu0 0.0
    %398 = vmatpush1.xpose.msra.mxu0 0.0
    %399 = vmatprep.subr.mxu0 0.0
    %400 = vmatpush1.xpose.msra.mxu0 0.0
    %401 = vmatprep.subr.mxu0 0.0
    %402 = vmatpush1.xpose.msra.mxu0 0.0
    %403 = vmatprep.subr.mxu0 0.0
    %404 = vmatpush1.xpose.msra.mxu0 0.0
    %405 = vmatprep.subr.mxu0 0.0
    %406 = vmatpush1.xpose.msra.mxu0 0.0
    %407 = vmatprep.subr.mxu0 0.0
    %408 = vmatpush1.xpose.msra.mxu0 0.0
    %409 = vmatprep.subr.mxu0 0.0
    %410 = vmatpush1.xpose.msra.mxu0 0.0
    %411 = vmatprep.subr.mxu0 0.0
    %412 = vmatpush1.xpose.msra.mxu0 0.0
    %413 = vmatprep.subr.mxu0 0.0
    %414 = vmatpush1.xpose.msra.mxu0 0.0
    %415 = vmatprep.subr.mxu0 0.0
    %416 = vmatpush1.xpose.msra.mxu0 0.0
    %417 = vmatprep.subr.mxu0 0.0
    %418 = vmatpush1.xpose.msra.mxu0 0.0
    %419 = vmatprep.subr.mxu0 0.0
    %420 = vmatpush1.xpose.msra.mxu0 0.0
    %421 = vmatprep.subr.mxu0 0.0
    %422 = vmatpush1.xpose.msra.mxu0 0.0
    %423 = vmatprep.subr.mxu0 0.0
    %424 = vmatpush1.xpose.msra.mxu0 0.0
    %425 = vmatprep.subr.mxu0 0.0
    %426 = vmatpush1.xpose.msra.mxu0 0.0
    %427 = vmatprep.subr.mxu0 0.0
    %428 = vmatpush1.xpose.msra.mxu0 %v395
    %429 = vmatprep.subr.mxu0 0.0
    %430 = vmatpush2.xpose.msra.mxu0 0.0
    %431 = vmatprep.subr.mxu0 0.0
    %432 = vmatpush2.xpose.msra.mxu0 0.0
    %433 = vmatprep.subr.mxu0 0.0
    %434 = vmatpush2.xpose.msra.mxu0 0.0
    %435 = vmatprep.subr.mxu0 0.0
    %436 = vmatpush2.xpose.msra.mxu0 0.0
    %437 = vmatprep.subr.mxu0 0.0
    %438 = vmatpush2.xpose.msra.mxu0 0.0
    %439 = vmatprep.subr.mxu0 0.0
    %440 = vmatpush2.xpose.msra.mxu0 0.0
    %441 = vmatprep.subr.mxu0 0.0
    %442 = vmatpush2.xpose.msra.mxu0 0.0
    %443 = vmatprep.subr.mxu0 0.0
    %444 = vmatpush2.xpose.msra.mxu0 0.0
    %445 = vmatprep.subr.mxu0 0.0
    %446 = vmatpush2.xpose.msra.mxu0 0.0
    %447 = vmatprep.subr.mxu0 0.0
    %448 = vmatpush2.xpose.msra.mxu0 0.0
    %449 = vmatprep.subr.mxu0 0.0
    %450 = vmatpush2.xpose.msra.mxu0 0.0
    %451 = vmatprep.subr.mxu0 0.0
    %452 = vmatpush2.xpose.msra.mxu0 0.0
    %453 = vmatprep.subr.mxu0 0.0
    %454 = vmatpush2.xpose.msra.mxu0 0.0
    %455 = vmatprep.subr.mxu0 0.0
    %456 = vmatpush2.xpose.msra.mxu0 0.0
    %457 = vmatprep.subr.mxu0 0.0
    %458 = vmatpush2.xpose.msra.mxu0 0.0
    %459 = vmatprep.subr.mxu0 0.0
    %460 = vmatpush2.xpose.msra.mxu0 0.0
    %461 = vmatprep.mubr.f32.mxu0 0.0
    %462 = vmatmul.mubr.f32.gmra.mxu0 %v393
    %v463 = vpop.f32.mrf.mxu0
    %v464 = vadd.f32 0.0, %v463
    %v465 = vpop.f32.mrf.mxu0
    %466 = vdwg.mxu0
    %469 = vrot.lane.b32.xlu0 %v386, 8
    %v470 = vpop.permute.xlu0 %469
    %471 = vrot.lane.b32.xlu0 %v464, 8
    %v472 = vpop.permute.xlu0 %471
    %vm475 = vcmask 130112
    %476 = vst.msk [vmem:[#allocation2] sm:$0xff] %vm475, %v470
    %477 = vst.msk [vmem:[#allocation2 + $0x8] sm:$0xff] %vm475, %v472
    %478 = vrot.lane.b32.xlu0 %v124, 112
    %v479 = vpop.permute.xlu0 %478
    %480 = vrot.lane.b32.xlu0 %v134, 80
    %v481 = vpop.permute.xlu0 %480
    %v482 = vsel %vm155, %v479, 0
    %v484 = vsel %vm155, %v481, 0
    %486 = vmatprep.subr.mxu0 0.0
    %487 = vmatpush1.xpose.msra.mxu0 0.0
    %488 = vmatprep.subr.mxu0 0.0
    %489 = vmatpush1.xpose.msra.mxu0 0.0
    %490 = vmatprep.subr.mxu0 0.0
    %491 = vmatpush1.xpose.msra.mxu0 0.0
    %492 = vmatprep.subr.mxu0 0.0
    %493 = vmatpush1.xpose.msra.mxu0 0.0
    %494 = vmatprep.subr.mxu0 0.0
    %495 = vmatpush1.xpose.msra.mxu0 0.0
    %496 = vmatprep.subr.mxu0 0.0
    %497 = vmatpush1.xpose.msra.mxu0 0.0
    %498 = vmatprep.subr.mxu0 0.0
    %499 = vmatpush1.xpose.msra.mxu0 0.0
    %500 = vmatprep.subr.mxu0 0.0
    %501 = vmatpush1.xpose.msra.mxu0 0.0
    %502 = vmatprep.subr.mxu0 0.0
    %503 = vmatpush1.xpose.msra.mxu0 0.0
    %504 = vmatprep.subr.mxu0 0.0
    %505 = vmatpush1.xpose.msra.mxu0 0.0
    %506 = vmatprep.subr.mxu0 0.0
    %507 = vmatpush1.xpose.msra.mxu0 0.0
    %508 = vmatprep.subr.mxu0 0.0
    %509 = vmatpush1.xpose.msra.mxu0 0.0
    %510 = vmatprep.subr.mxu0 0.0
    %511 = vmatpush1.xpose.msra.mxu0 0.0
    %512 = vmatprep.subr.mxu0 0.0
    %513 = vmatpush1.xpose.msra.mxu0 0.0
    %514 = vmatprep.subr.mxu0 0.0
    %515 = vmatpush1.xpose.msra.mxu0 0.0
    %516 = vmatprep.subr.mxu0 0.0
    %517 = vmatpush1.xpose.msra.mxu0 %v484
    %518 = vmatprep.subr.mxu0 0.0
    %519 = vmatpush2.xpose.msra.mxu0 0.0
    %520 = vmatprep.subr.mxu0 0.0
    %521 = vmatpush2.xpose.msra.mxu0 0.0
    %522 = vmatprep.subr.mxu0 0.0
    %523 = vmatpush2.xpose.msra.mxu0 0.0
    %524 = vmatprep.subr.mxu0 0.0
    %525 = vmatpush2.xpose.msra.mxu0 0.0
    %526 = vmatprep.subr.mxu0 0.0
    %527 = vmatpush2.xpose.msra.mxu0 0.0
    %528 = vmatprep.subr.mxu0 0.0
    %529 = vmatpush2.xpose.msra.mxu0 0.0
    %530 = vmatprep.subr.mxu0 0.0
    %531 = vmatpush2.xpose.msra.mxu0 0.0
    %532 = vmatprep.subr.mxu0 0.0
    %533 = vmatpush2.xpose.msra.mxu0 0.0
    %534 = vmatprep.subr.mxu0 0.0
    %535 = vmatpush2.xpose.msra.mxu0 0.0
    %536 = vmatprep.subr.mxu0 0.0
    %537 = vmatpush2.xpose.msra.mxu0 0.0
    %538 = vmatprep.subr.mxu0 0.0
    %539 = vmatpush2.xpose.msra.mxu0 0.0
    %540 = vmatprep.subr.mxu0 0.0
    %541 = vmatpush2.xpose.msra.mxu0 0.0
    %542 = vmatprep.subr.mxu0 0.0
    %543 = vmatpush2.xpose.msra.mxu0 0.0
    %544 = vmatprep.subr.mxu0 0.0
    %545 = vmatpush2.xpose.msra.mxu0 0.0
    %546 = vmatprep.subr.mxu0 0.0
    %547 = vmatpush2.xpose.msra.mxu0 0.0
    %548 = vmatprep.subr.mxu0 0.0
    %549 = vmatpush2.xpose.msra.mxu0 0.0
    %550 = vmatprep.mubr.f32.mxu0 0.0
    %551 = vmatmul.mubr.f32.gmra.mxu0 %v482
    %v552 = vpop.f32.mrf.mxu0
    %v553 = vadd.f32 0.0, %v552
    %v554 = vpop.f32.mrf.mxu0
    %555 = vdwg.mxu0
    %556 = vrot.lane.b32.xlu0 %v129, 112
    %v557 = vpop.permute.xlu0 %556
    %558 = vrot.lane.b32.xlu0 %v139, 80
    %v559 = vpop.permute.xlu0 %558
    %v560 = vsel %vm155, %v557, 0
    %v562 = vsel %vm155, %v559, 0
    %564 = vmatprep.subr.mxu0 0.0
    %565 = vmatpush1.xpose.msra.mxu0 0.0
    %566 = vmatprep.subr.mxu0 0.0
    %567 = vmatpush1.xpose.msra.mxu0 0.0
    %568 = vmatprep.subr.mxu0 0.0
    %569 = vmatpush1.xpose.msra.mxu0 0.0
    %570 = vmatprep.subr.mxu0 0.0
    %571 = vmatpush1.xpose.msra.mxu0 0.0
    %572 = vmatprep.subr.mxu0 0.0
    %573 = vmatpush1.xpose.msra.mxu0 0.0
    %574 = vmatprep.subr.mxu0 0.0
    %575 = vmatpush1.xpose.msra.mxu0 0.0
    %576 = vmatprep.subr.mxu0 0.0
    %577 = vmatpush1.xpose.msra.mxu0 0.0
    %578 = vmatprep.subr.mxu0 0.0
    %579 = vmatpush1.xpose.msra.mxu0 0.0
    %580 = vmatprep.subr.mxu0 0.0
    %581 = vmatpush1.xpose.msra.mxu0 0.0
    %582 = vmatprep.subr.mxu0 0.0
    %583 = vmatpush1.xpose.msra.mxu0 0.0
    %584 = vmatprep.subr.mxu0 0.0
    %585 = vmatpush1.xpose.msra.mxu0 0.0
    %586 = vmatprep.subr.mxu0 0.0
    %587 = vmatpush1.xpose.msra.mxu0 0.0
    %588 = vmatprep.subr.mxu0 0.0
    %589 = vmatpush1.xpose.msra.mxu0 0.0
    %590 = vmatprep.subr.mxu0 0.0
    %591 = vmatpush1.xpose.msra.mxu0 0.0
    %592 = vmatprep.subr.mxu0 0.0
    %593 = vmatpush1.xpose.msra.mxu0 0.0
    %594 = vmatprep.subr.mxu0 0.0
    %595 = vmatpush1.xpose.msra.mxu0 %v562
    %596 = vmatprep.subr.mxu0 0.0
    %597 = vmatpush2.xpose.msra.mxu0 0.0
    %598 = vmatprep.subr.mxu0 0.0
    %599 = vmatpush2.xpose.msra.mxu0 0.0
    %600 = vmatprep.subr.mxu0 0.0
    %601 = vmatpush2.xpose.msra.mxu0 0.0
    %602 = vmatprep.subr.mxu0 0.0
    %603 = vmatpush2.xpose.msra.mxu0 0.0
    %604 = vmatprep.subr.mxu0 0.0
    %605 = vmatpush2.xpose.msra.mxu0 0.0
    %606 = vmatprep.subr.mxu0 0.0
    %607 = vmatpush2.xpose.msra.mxu0 0.0
    %608 = vmatprep.subr.mxu0 0.0
    %609 = vmatpush2.xpose.msra.mxu0 0.0
    %610 = vmatprep.subr.mxu0 0.0
    %611 = vmatpush2.xpose.msra.mxu0 0.0
    %612 = vmatprep.subr.mxu0 0.0
    %613 = vmatpush2.xpose.msra.mxu0 0.0
    %614 = vmatprep.subr.mxu0 0.0
    %615 = vmatpush2.xpose.msra.mxu0 0.0
    %616 = vmatprep.subr.mxu0 0.0
    %617 = vmatpush2.xpose.msra.mxu0 0.0
    %618 = vmatprep.subr.mxu0 0.0
    %619 = vmatpush2.xpose.msra.mxu0 0.0
    %620 = vmatprep.subr.mxu0 0.0
    %621 = vmatpush2.xpose.msra.mxu0 0.0
    %622 = vmatprep.subr.mxu0 0.0
    %623 = vmatpush2.xpose.msra.mxu0 0.0
    %624 = vmatprep.subr.mxu0 0.0
    %625 = vmatpush2.xpose.msra.mxu0 0.0
    %626 = vmatprep.subr.mxu0 0.0
    %627 = vmatpush2.xpose.msra.mxu0 0.0
    %628 = vmatprep.mubr.f32.mxu0 0.0
    %629 = vmatmul.mubr.f32.gmra.mxu0 %v560
    %v630 = vpop.f32.mrf.mxu0
    %v631 = vadd.f32 0.0, %v630
    %v632 = vpop.f32.mrf.mxu0
    %633 = vdwg.mxu0
    %636 = vrot.lane.b32.xlu0 %v553, 16
    %v637 = vpop.permute.xlu0 %636
    %638 = vrot.lane.b32.xlu0 %v631, 16
    %v639 = vpop.permute.xlu0 %638
    %vm642 = vcmask 195712
    %643 = vst.msk [vmem:[#allocation2] sm:$0xff] %vm642, %v637
    %644 = vst.msk [vmem:[#allocation2 + $0x8] sm:$0xff] %vm642, %v639
    %645 = vrot.lane.b32.xlu0 %v124, 104
    %v646 = vpop.permute.xlu0 %645
    %647 = vrot.lane.b32.xlu0 %v134, 72
    %v648 = vpop.permute.xlu0 %647
    %v649 = vsel %vm155, %v646, 0
    %v651 = vsel %vm155, %v648, 0
    %653 = vmatprep.subr.mxu0 0.0
    %654 = vmatpush1.xpose.msra.mxu0 0.0
    %655 = vmatprep.subr.mxu0 0.0
    %656 = vmatpush1.xpose.msra.mxu0 0.0
    %657 = vmatprep.subr.mxu0 0.0
    %658 = vmatpush1.xpose.msra.mxu0 0.0
    %659 = vmatprep.subr.mxu0 0.0
    %660 = vmatpush1.xpose.msra.mxu0 0.0
    %661 = vmatprep.subr.mxu0 0.0
    %662 = vmatpush1.xpose.msra.mxu0 0.0
    %663 = vmatprep.subr.mxu0 0.0
    %664 = vmatpush1.xpose.msra.mxu0 0.0
    %665 = vmatprep.subr.mxu0 0.0
    %666 = vmatpush1.xpose.msra.mxu0 0.0
    %667 = vmatprep.subr.mxu0 0.0
    %668 = vmatpush1.xpose.msra.mxu0 0.0
    %669 = vmatprep.subr.mxu0 0.0
    %670 = vmatpush1.xpose.msra.mxu0 0.0
    %671 = vmatprep.subr.mxu0 0.0
    %672 = vmatpush1.xpose.msra.mxu0 0.0
    %673 = vmatprep.subr.mxu0 0.0
    %674 = vmatpush1.xpose.msra.mxu0 0.0
    %675 = vmatprep.subr.mxu0 0.0
    %676 = vmatpush1.xpose.msra.mxu0 0.0
    %677 = vmatprep.subr.mxu0 0.0
    %678 = vmatpush1.xpose.msra.mxu0 0.0
    %679 = vmatprep.subr.mxu0 0.0
    %680 = vmatpush1.xpose.msra.mxu0 0.0
    %681 = vmatprep.subr.mxu0 0.0
    %682 = vmatpush1.xpose.msra.mxu0 0.0
    %683 = vmatprep.subr.mxu0 0.0
    %684 = vmatpush1.xpose.msra.mxu0 %v651
    %685 = vmatprep.subr.mxu0 0.0
    %686 = vmatpush2.xpose.msra.mxu0 0.0
    %687 = vmatprep.subr.mxu0 0.0
    %688 = vmatpush2.xpose.msra.mxu0 0.0
    %689 = vmatprep.subr.mxu0 0.0
    %690 = vmatpush2.xpose.msra.mxu0 0.0
    %691 = vmatprep.subr.mxu0 0.0
    %692 = vmatpush2.xpose.msra.mxu0 0.0
    %693 = vmatprep.subr.mxu0 0.0
    %694 = vmatpush2.xpose.msra.mxu0 0.0
    %695 = vmatprep.subr.mxu0 0.0
    %696 = vmatpush2.xpose.msra.mxu0 0.0
    %697 = vmatprep.subr.mxu0 0.0
    %698 = vmatpush2.xpose.msra.mxu0 0.0
    %699 = vmatprep.subr.mxu0 0.0
    %700 = vmatpush2.xpose.msra.mxu0 0.0
    %701 = vmatprep.subr.mxu0 0.0
    %702 = vmatpush2.xpose.msra.mxu0 0.0
    %703 = vmatprep.subr.mxu0 0.0
    %704 = vmatpush2.xpose.msra.mxu0 0.0
    %705 = vmatprep.subr.mxu0 0.0
    %706 = vmatpush2.xpose.msra.mxu0 0.0
    %707 = vmatprep.subr.mxu0 0.0
    %708 = vmatpush2.xpose.msra.mxu0 0.0
    %709 = vmatprep.subr.mxu0 0.0
    %710 = vmatpush2.xpose.msra.mxu0 0.0
    %711 = vmatprep.subr.mxu0 0.0
    %712 = vmatpush2.xpose.msra.mxu0 0.0
    %713 = vmatprep.subr.mxu0 0.0
    %714 = vmatpush2.xpose.msra.mxu0 0.0
    %715 = vmatprep.subr.mxu0 0.0
    %716 = vmatpush2.xpose.msra.mxu0 0.0
    %717 = vmatprep.mubr.f32.mxu0 0.0
    %718 = vmatmul.mubr.f32.gmra.mxu0 %v649
    %v719 = vpop.f32.mrf.mxu0
    %v720 = vadd.f32 0.0, %v719
    %v721 = vpop.f32.mrf.mxu0
    %722 = vdwg.mxu0
    %723 = vrot.lane.b32.xlu0 %v129, 104
    %v724 = vpop.permute.xlu0 %723
    %725 = vrot.lane.b32.xlu0 %v139, 72
    %v726 = vpop.permute.xlu0 %725
    %v727 = vsel %vm155, %v724, 0
    %v729 = vsel %vm155, %v726, 0
    %731 = vmatprep.subr.mxu0 0.0
    %732 = vmatpush1.xpose.msra.mxu0 0.0
    %733 = vmatprep.subr.mxu0 0.0
    %734 = vmatpush1.xpose.msra.mxu0 0.0
    %735 = vmatprep.subr.mxu0 0.0
    %736 = vmatpush1.xpose.msra.mxu0 0.0
    %737 = vmatprep.subr.mxu0 0.0
    %738 = vmatpush1.xpose.msra.mxu0 0.0
    %739 = vmatprep.subr.mxu0 0.0
    %740 = vmatpush1.xpose.msra.mxu0 0.0
    %741 = vmatprep.subr.mxu0 0.0
    %742 = vmatpush1.xpose.msra.mxu0 0.0
    %743 = vmatprep.subr.mxu0 0.0
    %744 = vmatpush1.xpose.msra.mxu0 0.0
    %745 = vmatprep.subr.mxu0 0.0
    %746 = vmatpush1.xpose.msra.mxu0 0.0
    %747 = vmatprep.subr.mxu0 0.0
    %748 = vmatpush1.xpose.msra.mxu0 0.0
    %749 = vmatprep.subr.mxu0 0.0
    %750 = vmatpush1.xpose.msra.mxu0 0.0
    %751 = vmatprep.subr.mxu0 0.0
    %752 = vmatpush1.xpose.msra.mxu0 0.0
    %753 = vmatprep.subr.mxu0 0.0
    %754 = vmatpush1.xpose.msra.mxu0 0.0
    %755 = vmatprep.subr.mxu0 0.0
    %756 = vmatpush1.xpose.msra.mxu0 0.0
    %757 = vmatprep.subr.mxu0 0.0
    %758 = vmatpush1.xpose.msra.mxu0 0.0
    %759 = vmatprep.subr.mxu0 0.0
    %760 = vmatpush1.xpose.msra.mxu0 0.0
    %761 = vmatprep.subr.mxu0 0.0
    %762 = vmatpush1.xpose.msra.mxu0 %v729
    %763 = vmatprep.subr.mxu0 0.0
    %764 = vmatpush2.xpose.msra.mxu0 0.0
    %765 = vmatprep.subr.mxu0 0.0
    %766 = vmatpush2.xpose.msra.mxu0 0.0
    %767 = vmatprep.subr.mxu0 0.0
    %768 = vmatpush2.xpose.msra.mxu0 0.0
    %769 = vmatprep.subr.mxu0 0.0
    %770 = vmatpush2.xpose.msra.mxu0 0.0
    %771 = vmatprep.subr.mxu0 0.0
    %772 = vmatpush2.xpose.msra.mxu0 0.0
    %773 = vmatprep.subr.mxu0 0.0
    %774 = vmatpush2.xpose.msra.mxu0 0.0
    %775 = vmatprep.subr.mxu0 0.0
    %776 = vmatpush2.xpose.msra.mxu0 0.0
    %777 = vmatprep.subr.mxu0 0.0
    %778 = vmatpush2.xpose.msra.mxu0 0.0
    %779 = vmatprep.subr.mxu0 0.0
    %780 = vmatpush2.xpose.msra.mxu0 0.0
    %781 = vmatprep.subr.mxu0 0.0
    %782 = vmatpush2.xpose.msra.mxu0 0.0
    %783 = vmatprep.subr.mxu0 0.0
    %784 = vmatpush2.xpose.msra.mxu0 0.0
    %785 = vmatprep.subr.mxu0 0.0
    %786 = vmatpush2.xpose.msra.mxu0 0.0
    %787 = vmatprep.subr.mxu0 0.0
    %788 = vmatpush2.xpose.msra.mxu0 0.0
    %789 = vmatprep.subr.mxu0 0.0
    %790 = vmatpush2.xpose.msra.mxu0 0.0
    %791 = vmatprep.subr.mxu0 0.0
    %792 = vmatpush2.xpose.msra.mxu0 0.0
    %793 = vmatprep.subr.mxu0 0.0
    %794 = vmatpush2.xpose.msra.mxu0 0.0
    %795 = vmatprep.mubr.f32.mxu0 0.0
    %796 = vmatmul.mubr.f32.gmra.mxu0 %v727
    %v797 = vpop.f32.mrf.mxu0
    %v798 = vadd.f32 0.0, %v797
    %v799 = vpop.f32.mrf.mxu0
    %800 = vdwg.mxu0
    %803 = vrot.lane.b32.xlu0 %v720, 24
    %v804 = vpop.permute.xlu0 %803
    %805 = vrot.lane.b32.xlu0 %v798, 24
    %v806 = vpop.permute.xlu0 %805
    %vm809 = vcmask 261312
    %810 = vst.msk [vmem:[#allocation2] sm:$0xff] %vm809, %v804
    %811 = vst.msk [vmem:[#allocation2 + $0x8] sm:$0xff] %vm809, %v806
    %v812 = vld [vmem:[#allocation2] sm:$0xff]
    %v813 = vld [vmem:[#allocation2 + $0x8] sm:$0xff]
    %v814 = vsel %vm38, %v812, -inf
    %v815 = vrot.slane %v814, 4
    %v816 = vmax.f32 %v814, %v815
    %v817 = vrot.slane %v816, 2
    %v818 = vmax.f32 %v816, %v817
    %v819 = vrot.slane %v818, 1
    %v820 = vmax.f32 %v818, %v819
    %v821 = vsel %vm38, %v813, -inf
    %v822 = vrot.slane %v821, 4
    %v823 = vmax.f32 %v821, %v822
    %v824 = vrot.slane %v823, 2
    %v825 = vmax.f32 %v823, %v824
    %v826 = vrot.slane %v825, 1
    %v827 = vmax.f32 %v825, %v826
    %v828 = vsub.f32 %v812, %v820
    %v829 = vsub.f32 %v813, %v827
    %v830 = vmul.f32 %v828, 1.442695
    %v831 = vpow.pop %v830
    %v832 = vmul.f32 %v829, 1.442695
    %v833 = vpow.pop %v832
    %v834 = vsel %vm38, %v831, 0.0
    %v835 = vrot.slane %v834, 4
    %v836 = vadd.f32 %v834, %v835
    %v837 = vrot.slane %v836, 2
    %v838 = vadd.f32 %v836, %v837
    %v839 = vrot.slane %v838, 1
    %v840 = vadd.f32 %v838, %v839
    %v841 = vsel %vm38, %v833, 0.0
    %v842 = vrot.slane %v841, 4
    %v843 = vadd.f32 %v841, %v842
    %v844 = vrot.slane %v843, 2
    %v845 = vadd.f32 %v843, %v844
    %v846 = vrot.slane %v845, 1
    %v847 = vadd.f32 %v845, %v846
    %v848 = vrcp.pop %v840
    %v849 = vrcp.pop %v847
    %v850 = vmul.f32 %v831, %v848
    %v851 = vmul.f32 %v833, %v849
    %853 = vrot.lane.b32.xlu0 %v144, 64
    %v854 = vpop.permute.xlu0 %853
    %v857 = vsel %vm155, %v850, 0
    %859 = vmatprep.subr.mxu0 0.0
    %860 = vmatpush1.msra.mxu0 0.0
    %861 = vmatprep.subr.mxu0 0.0
    %862 = vmatpush1.msra.mxu0 0.0
    %863 = vmatprep.subr.mxu0 0.0
    %864 = vmatpush1.msra.mxu0 0.0
    %865 = vmatprep.subr.mxu0 0.0
    %866 = vmatpush1.msra.mxu0 0.0
    %867 = vmatprep.subr.mxu0 0.0
    %868 = vmatpush1.msra.mxu0 0.0
    %869 = vmatprep.subr.mxu0 0.0
    %870 = vmatpush1.msra.mxu0 0.0
    %871 = vmatprep.subr.mxu0 0.0
    %872 = vmatpush1.msra.mxu0 0.0
    %873 = vmatprep.subr.mxu0 0.0
    %874 = vmatpush1.msra.mxu0 0.0
    %875 = vmatprep.subr.mxu0 0.0
    %876 = vmatpush1.msra.mxu0 0.0
    %877 = vmatprep.subr.mxu0 0.0
    %878 = vmatpush1.msra.mxu0 0.0
    %879 = vmatprep.subr.mxu0 0.0
    %880 = vmatpush1.msra.mxu0 0.0
    %881 = vmatprep.subr.mxu0 0.0
    %882 = vmatpush1.msra.mxu0 0.0
    %883 = vmatprep.subr.mxu0 0.0
    %884 = vmatpush1.msra.mxu0 0.0
    %885 = vmatprep.subr.mxu0 0.0
    %886 = vmatpush1.msra.mxu0 0.0
    %887 = vmatprep.subr.mxu0 0.0
    %888 = vmatpush1.msra.mxu0 0.0
    %889 = vmatprep.subr.mxu0 0.0
    %890 = vmatpush1.msra.mxu0 %v854
    %891 = vmatprep.subr.mxu0 0.0
    %892 = vmatpush2.msra.mxu0 0.0
    %893 = vmatprep.subr.mxu0 0.0
    %894 = vmatpush2.msra.mxu0 0.0
    %895 = vmatprep.subr.mxu0 0.0
    %896 = vmatpush2.msra.mxu0 0.0
    %897 = vmatprep.subr.mxu0 0.0
    %898 = vmatpush2.msra.mxu0 0.0
    %899 = vmatprep.subr.mxu0 0.0
    %900 = vmatpush2.msra.mxu0 0.0
    %901 = vmatprep.subr.mxu0 0.0
    %902 = vmatpush2.msra.mxu0 0.0
    %903 = vmatprep.subr.mxu0 0.0
    %904 = vmatpush2.msra.mxu0 0.0
    %905 = vmatprep.subr.mxu0 0.0
    %906 = vmatpush2.msra.mxu0 0.0
    %907 = vmatprep.subr.mxu0 0.0
    %908 = vmatpush2.msra.mxu0 0.0
    %909 = vmatprep.subr.mxu0 0.0
    %910 = vmatpush2.msra.mxu0 0.0
    %911 = vmatprep.subr.mxu0 0.0
    %912 = vmatpush2.msra.mxu0 0.0
    %913 = vmatprep.subr.mxu0 0.0
    %914 = vmatpush2.msra.mxu0 0.0
    %915 = vmatprep.subr.mxu0 0.0
    %916 = vmatpush2.msra.mxu0 0.0
    %917 = vmatprep.subr.mxu0 0.0
    %918 = vmatpush2.msra.mxu0 0.0
    %919 = vmatprep.subr.mxu0 0.0
    %920 = vmatpush2.msra.mxu0 0.0
    %921 = vmatprep.subr.mxu0 0.0
    %922 = vmatpush2.msra.mxu0 0.0
    %923 = vmatprep.mubr.f32.mxu0 0.0
    %924 = vmatmul.mubr.f32.gmra.mxu0 %v857
    %v925 = vpop.f32.mrf.mxu0
    %v926 = vadd.f32 0.0, %v925
    %v927 = vpop.f32.mrf.mxu0
    %928 = vdwg.mxu0
    %930 = vrot.lane.b32.xlu0 %v149, 64
    %v931 = vpop.permute.xlu0 %930
    %v934 = vsel %vm155, %v851, 0
    %936 = vmatprep.subr.mxu0 0.0
    %937 = vmatpush1.msra.mxu0 0.0
    %938 = vmatprep.subr.mxu0 0.0
    %939 = vmatpush1.msra.mxu0 0.0
    %940 = vmatprep.subr.mxu0 0.0
    %941 = vmatpush1.msra.mxu0 0.0
    %942 = vmatprep.subr.mxu0 0.0
    %943 = vmatpush1.msra.mxu0 0.0
    %944 = vmatprep.subr.mxu0 0.0
    %945 = vmatpush1.msra.mxu0 0.0
    %946 = vmatprep.subr.mxu0 0.0
    %947 = vmatpush1.msra.mxu0 0.0
    %948 = vmatprep.subr.mxu0 0.0
    %949 = vmatpush1.msra.mxu0 0.0
    %950 = vmatprep.subr.mxu0 0.0
    %951 = vmatpush1.msra.mxu0 0.0
    %952 = vmatprep.subr.mxu0 0.0
    %953 = vmatpush1.msra.mxu0 0.0
    %954 = vmatprep.subr.mxu0 0.0
    %955 = vmatpush1.msra.mxu0 0.0
    %956 = vmatprep.subr.mxu0 0.0
    %957 = vmatpush1.msra.mxu0 0.0
    %958 = vmatprep.subr.mxu0 0.0
    %959 = vmatpush1.msra.mxu0 0.0
    %960 = vmatprep.subr.mxu0 0.0
    %961 = vmatpush1.msra.mxu0 0.0
    %962 = vmatprep.subr.mxu0 0.0
    %963 = vmatpush1.msra.mxu0 0.0
    %964 = vmatprep.subr.mxu0 0.0
    %965 = vmatpush1.msra.mxu0 0.0
    %966 = vmatprep.subr.mxu0 0.0
    %967 = vmatpush1.msra.mxu0 %v931
    %968 = vmatprep.subr.mxu0 0.0
    %969 = vmatpush2.msra.mxu0 0.0
    %970 = vmatprep.subr.mxu0 0.0
    %971 = vmatpush2.msra.mxu0 0.0
    %972 = vmatprep.subr.mxu0 0.0
    %973 = vmatpush2.msra.mxu0 0.0
    %974 = vmatprep.subr.mxu0 0.0
    %975 = vmatpush2.msra.mxu0 0.0
    %976 = vmatprep.subr.mxu0 0.0
    %977 = vmatpush2.msra.mxu0 0.0
    %978 = vmatprep.subr.mxu0 0.0
    %979 = vmatpush2.msra.mxu0 0.0
    %980 = vmatprep.subr.mxu0 0.0
    %981 = vmatpush2.msra.mxu0 0.0
    %982 = vmatprep.subr.mxu0 0.0
    %983 = vmatpush2.msra.mxu0 0.0
    %984 = vmatprep.subr.mxu0 0.0
    %985 = vmatpush2.msra.mxu0 0.0
    %986 = vmatprep.subr.mxu0 0.0
    %987 = vmatpush2.msra.mxu0 0.0
    %988 = vmatprep.subr.mxu0 0.0
    %989 = vmatpush2.msra.mxu0 0.0
    %990 = vmatprep.subr.mxu0 0.0
    %991 = vmatpush2.msra.mxu0 0.0
    %992 = vmatprep.subr.mxu0 0.0
    %993 = vmatpush2.msra.mxu0 0.0
    %994 = vmatprep.subr.mxu0 0.0
    %995 = vmatpush2.msra.mxu0 0.0
    %996 = vmatprep.subr.mxu0 0.0
    %997 = vmatpush2.msra.mxu0 0.0
    %998 = vmatprep.subr.mxu0 0.0
    %999 = vmatpush2.msra.mxu0 0.0
    %1000 = vmatprep.mubr.f32.mxu0 0.0
    %1001 = vmatmul.mubr.f32.gmra.mxu0 %v934
    %v1002 = vpop.f32.mrf.mxu0
    %v1003 = vadd.f32 0.0, %v1002
    %v1004 = vpop.f32.mrf.mxu0
    %1005 = vdwg.mxu0
    %1006 = vst.msk [vmem:[#allocation3] sm:$0xff] %vm155, %v926
    %1007 = vst.msk [vmem:[#allocation3 + $0x8] sm:$0xff] %vm155, %v1003
    %1008 = vrot.lane.b32.xlu0 %v850, 120
    %v1009 = vpop.permute.xlu0 %1008
    %1010 = vrot.lane.b32.xlu0 %v144, 56
    %v1011 = vpop.permute.xlu0 %1010
    %v1013 = vsel %vm155, %v1009, 0
    %1015 = vmatprep.subr.mxu0 0.0
    %1016 = vmatpush1.msra.mxu0 0.0
    %1017 = vmatprep.subr.mxu0 0.0
    %1018 = vmatpush1.msra.mxu0 0.0
    %1019 = vmatprep.subr.mxu0 0.0
    %1020 = vmatpush1.msra.mxu0 0.0
    %1021 = vmatprep.subr.mxu0 0.0
    %1022 = vmatpush1.msra.mxu0 0.0
    %1023 = vmatprep.subr.mxu0 0.0
    %1024 = vmatpush1.msra.mxu0 0.0
    %1025 = vmatprep.subr.mxu0 0.0
    %1026 = vmatpush1.msra.mxu0 0.0
    %1027 = vmatprep.subr.mxu0 0.0
    %1028 = vmatpush1.msra.mxu0 0.0
    %1029 = vmatprep.subr.mxu0 0.0
    %1030 = vmatpush1.msra.mxu0 0.0
    %1031 = vmatprep.subr.mxu0 0.0
    %1032 = vmatpush1.msra.mxu0 0.0
    %1033 = vmatprep.subr.mxu0 0.0
    %1034 = vmatpush1.msra.mxu0 0.0
    %1035 = vmatprep.subr.mxu0 0.0
    %1036 = vmatpush1.msra.mxu0 0.0
    %1037 = vmatprep.subr.mxu0 0.0
    %1038 = vmatpush1.msra.mxu0 0.0
    %1039 = vmatprep.subr.mxu0 0.0
    %1040 = vmatpush1.msra.mxu0 0.0
    %1041 = vmatprep.subr.mxu0 0.0
    %1042 = vmatpush1.msra.mxu0 0.0
    %1043 = vmatprep.subr.mxu0 0.0
    %1044 = vmatpush1.msra.mxu0 0.0
    %1045 = vmatprep.subr.mxu0 0.0
    %1046 = vmatpush1.msra.mxu0 %v1011
    %1047 = vmatprep.subr.mxu0 0.0
    %1048 = vmatpush2.msra.mxu0 0.0
    %1049 = vmatprep.subr.mxu0 0.0
    %1050 = vmatpush2.msra.mxu0 0.0
    %1051 = vmatprep.subr.mxu0 0.0
    %1052 = vmatpush2.msra.mxu0 0.0
    %1053 = vmatprep.subr.mxu0 0.0
    %1054 = vmatpush2.msra.mxu0 0.0
    %1055 = vmatprep.subr.mxu0 0.0
    %1056 = vmatpush2.msra.mxu0 0.0
    %1057 = vmatprep.subr.mxu0 0.0
    %1058 = vmatpush2.msra.mxu0 0.0
    %1059 = vmatprep.subr.mxu0 0.0
    %1060 = vmatpush2.msra.mxu0 0.0
    %1061 = vmatprep.subr.mxu0 0.0
    %1062 = vmatpush2.msra.mxu0 0.0
    %1063 = vmatprep.subr.mxu0 0.0
    %1064 = vmatpush2.msra.mxu0 0.0
    %1065 = vmatprep.subr.mxu0 0.0
    %1066 = vmatpush2.msra.mxu0 0.0
    %1067 = vmatprep.subr.mxu0 0.0
    %1068 = vmatpush2.msra.mxu0 0.0
    %1069 = vmatprep.subr.mxu0 0.0
    %1070 = vmatpush2.msra.mxu0 0.0
    %1071 = vmatprep.subr.mxu0 0.0
    %1072 = vmatpush2.msra.mxu0 0.0
    %1073 = vmatprep.subr.mxu0 0.0
    %1074 = vmatpush2.msra.mxu0 0.0
    %1075 = vmatprep.subr.mxu0 0.0
    %1076 = vmatpush2.msra.mxu0 0.0
    %1077 = vmatprep.subr.mxu0 0.0
    %1078 = vmatpush2.msra.mxu0 0.0
    %1079 = vmatprep.mubr.f32.mxu0 0.0
    %1080 = vmatmul.mubr.f32.gmra.mxu0 %v1013
    %v1081 = vpop.f32.mrf.mxu0
    %v1082 = vadd.f32 0.0, %v1081
    %v1083 = vpop.f32.mrf.mxu0
    %1084 = vdwg.mxu0
    %1085 = vrot.lane.b32.xlu0 %v851, 120
    %v1086 = vpop.permute.xlu0 %1085
    %1087 = vrot.lane.b32.xlu0 %v149, 56
    %v1088 = vpop.permute.xlu0 %1087
    %v1090 = vsel %vm155, %v1086, 0
    %1092 = vmatprep.subr.mxu0 0.0
    %1093 = vmatpush1.msra.mxu0 0.0
    %1094 = vmatprep.subr.mxu0 0.0
    %1095 = vmatpush1.msra.mxu0 0.0
    %1096 = vmatprep.subr.mxu0 0.0
    %1097 = vmatpush1.msra.mxu0 0.0
    %1098 = vmatprep.subr.mxu0 0.0
    %1099 = vmatpush1.msra.mxu0 0.0
    %1100 = vmatprep.subr.mxu0 0.0
    %1101 = vmatpush1.msra.mxu0 0.0
    %1102 = vmatprep.subr.mxu0 0.0
    %1103 = vmatpush1.msra.mxu0 0.0
    %1104 = vmatprep.subr.mxu0 0.0
    %1105 = vmatpush1.msra.mxu0 0.0
    %1106 = vmatprep.subr.mxu0 0.0
    %1107 = vmatpush1.msra.mxu0 0.0
    %1108 = vmatprep.subr.mxu0 0.0
    %1109 = vmatpush1.msra.mxu0 0.0
    %1110 = vmatprep.subr.mxu0 0.0
    %1111 = vmatpush1.msra.mxu0 0.0
    %1112 = vmatprep.subr.mxu0 0.0
    %1113 = vmatpush1.msra.mxu0 0.0
    %1114 = vmatprep.subr.mxu0 0.0
    %1115 = vmatpush1.msra.mxu0 0.0
    %1116 = vmatprep.subr.mxu0 0.0
    %1117 = vmatpush1.msra.mxu0 0.0
    %1118 = vmatprep.subr.mxu0 0.0
    %1119 = vmatpush1.msra.mxu0 0.0
    %1120 = vmatprep.subr.mxu0 0.0
    %1121 = vmatpush1.msra.mxu0 0.0
    %1122 = vmatprep.subr.mxu0 0.0
    %1123 = vmatpush1.msra.mxu0 %v1088
    %1124 = vmatprep.subr.mxu0 0.0
    %1125 = vmatpush2.msra.mxu0 0.0
    %1126 = vmatprep.subr.mxu0 0.0
    %1127 = vmatpush2.msra.mxu0 0.0
    %1128 = vmatprep.subr.mxu0 0.0
    %1129 = vmatpush2.msra.mxu0 0.0
    %1130 = vmatprep.subr.mxu0 0.0
    %1131 = vmatpush2.msra.mxu0 0.0
    %1132 = vmatprep.subr.mxu0 0.0
    %1133 = vmatpush2.msra.mxu0 0.0
    %1134 = vmatprep.subr.mxu0 0.0
    %1135 = vmatpush2.msra.mxu0 0.0
    %1136 = vmatprep.subr.mxu0 0.0
    %1137 = vmatpush2.msra.mxu0 0.0
    %1138 = vmatprep.subr.mxu0 0.0
    %1139 = vmatpush2.msra.mxu0 0.0
    %1140 = vmatprep.subr.mxu0 0.0
    %1141 = vmatpush2.msra.mxu0 0.0
    %1142 = vmatprep.subr.mxu0 0.0
    %1143 = vmatpush2.msra.mxu0 0.0
    %1144 = vmatprep.subr.mxu0 0.0
    %1145 = vmatpush2.msra.mxu0 0.0
    %1146 = vmatprep.subr.mxu0 0.0
    %1147 = vmatpush2.msra.mxu0 0.0
    %1148 = vmatprep.subr.mxu0 0.0
    %1149 = vmatpush2.msra.mxu0 0.0
    %1150 = vmatprep.subr.mxu0 0.0
    %1151 = vmatpush2.msra.mxu0 0.0
    %1152 = vmatprep.subr.mxu0 0.0
    %1153 = vmatpush2.msra.mxu0 0.0
    %1154 = vmatprep.subr.mxu0 0.0
    %1155 = vmatpush2.msra.mxu0 0.0
    %1156 = vmatprep.mubr.f32.mxu0 0.0
    %1157 = vmatmul.mubr.f32.gmra.mxu0 %v1090
    %v1158 = vpop.f32.mrf.mxu0
    %v1159 = vadd.f32 0.0, %v1158
    %v1160 = vpop.f32.mrf.mxu0
    %1161 = vdwg.mxu0
    %1164 = vrot.lane.b32.xlu0 %v1082, 8
    %v1165 = vpop.permute.xlu0 %1164
    %1166 = vrot.lane.b32.xlu0 %v1159, 8
    %v1167 = vpop.permute.xlu0 %1166
    %1170 = vst.msk [vmem:[#allocation3] sm:$0xff] %vm475, %v1165
    %1171 = vst.msk [vmem:[#allocation3 + $0x8] sm:$0xff] %vm475, %v1167
    %1172 = vrot.lane.b32.xlu0 %v850, 112
    %v1173 = vpop.permute.xlu0 %1172
    %1174 = vrot.lane.b32.xlu0 %v144, 48
    %v1175 = vpop.permute.xlu0 %1174
    %v1177 = vsel %vm155, %v1173, 0
    %1179 = vmatprep.subr.mxu0 0.0
    %1180 = vmatpush1.msra.mxu0 0.0
    %1181 = vmatprep.subr.mxu0 0.0
    %1182 = vmatpush1.msra.mxu0 0.0
    %1183 = vmatprep.subr.mxu0 0.0
    %1184 = vmatpush1.msra.mxu0 0.0
    %1185 = vmatprep.subr.mxu0 0.0
    %1186 = vmatpush1.msra.mxu0 0.0
    %1187 = vmatprep.subr.mxu0 0.0
    %1188 = vmatpush1.msra.mxu0 0.0
    %1189 = vmatprep.subr.mxu0 0.0
    %1190 = vmatpush1.msra.mxu0 0.0
    %1191 = vmatprep.subr.mxu0 0.0
    %1192 = vmatpush1.msra.mxu0 0.0
    %1193 = vmatprep.subr.mxu0 0.0
    %1194 = vmatpush1.msra.mxu0 0.0
    %1195 = vmatprep.subr.mxu0 0.0
    %1196 = vmatpush1.msra.mxu0 0.0
    %1197 = vmatprep.subr.mxu0 0.0
    %1198 = vmatpush1.msra.mxu0 0.0
    %1199 = vmatprep.subr.mxu0 0.0
    %1200 = vmatpush1.msra.mxu0 0.0
    %1201 = vmatprep.subr.mxu0 0.0
    %1202 = vmatpush1.msra.mxu0 0.0
    %1203 = vmatprep.subr.mxu0 0.0
    %1204 = vmatpush1.msra.mxu0 0.0
    %1205 = vmatprep.subr.mxu0 0.0
    %1206 = vmatpush1.msra.mxu0 0.0
    %1207 = vmatprep.subr.mxu0 0.0
    %1208 = vmatpush1.msra.mxu0 0.0
    %1209 = vmatprep.subr.mxu0 0.0
    %1210 = vmatpush1.msra.mxu0 %v1175
    %1211 = vmatprep.subr.mxu0 0.0
    %1212 = vmatpush2.msra.mxu0 0.0
    %1213 = vmatprep.subr.mxu0 0.0
    %1214 = vmatpush2.msra.mxu0 0.0
    %1215 = vmatprep.subr.mxu0 0.0
    %1216 = vmatpush2.msra.mxu0 0.0
    %1217 = vmatprep.subr.mxu0 0.0
    %1218 = vmatpush2.msra.mxu0 0.0
    %1219 = vmatprep.subr.mxu0 0.0
    %1220 = vmatpush2.msra.mxu0 0.0
    %1221 = vmatprep.subr.mxu0 0.0
    %1222 = vmatpush2.msra.mxu0 0.0
    %1223 = vmatprep.subr.mxu0 0.0
    %1224 = vmatpush2.msra.mxu0 0.0
    %1225 = vmatprep.subr.mxu0 0.0
    %1226 = vmatpush2.msra.mxu0 0.0
    %1227 = vmatprep.subr.mxu0 0.0
    %1228 = vmatpush2.msra.mxu0 0.0
    %1229 = vmatprep.subr.mxu0 0.0
    %1230 = vmatpush2.msra.mxu0 0.0
    %1231 = vmatprep.subr.mxu0 0.0
    %1232 = vmatpush2.msra.mxu0 0.0
    %1233 = vmatprep.subr.mxu0 0.0
    %1234 = vmatpush2.msra.mxu0 0.0
    %1235 = vmatprep.subr.mxu0 0.0
    %1236 = vmatpush2.msra.mxu0 0.0
    %1237 = vmatprep.subr.mxu0 0.0
    %1238 = vmatpush2.msra.mxu0 0.0
    %1239 = vmatprep.subr.mxu0 0.0
    %1240 = vmatpush2.msra.mxu0 0.0
    %1241 = vmatprep.subr.mxu0 0.0
    %1242 = vmatpush2.msra.mxu0 0.0
    %1243 = vmatprep.mubr.f32.mxu0 0.0
    %1244 = vmatmul.mubr.f32.gmra.mxu0 %v1177
    %v1245 = vpop.f32.mrf.mxu0
    %v1246 = vadd.f32 0.0, %v1245
    %v1247 = vpop.f32.mrf.mxu0
    %1248 = vdwg.mxu0
    %1249 = vrot.lane.b32.xlu0 %v851, 112
    %v1250 = vpop.permute.xlu0 %1249
    %1251 = vrot.lane.b32.xlu0 %v149, 48
    %v1252 = vpop.permute.xlu0 %1251
    %v1254 = vsel %vm155, %v1250, 0
    %1256 = vmatprep.subr.mxu0 0.0
    %1257 = vmatpush1.msra.mxu0 0.0
    %1258 = vmatprep.subr.mxu0 0.0
    %1259 = vmatpush1.msra.mxu0 0.0
    %1260 = vmatprep.subr.mxu0 0.0
    %1261 = vmatpush1.msra.mxu0 0.0
    %1262 = vmatprep.subr.mxu0 0.0
    %1263 = vmatpush1.msra.mxu0 0.0
    %1264 = vmatprep.subr.mxu0 0.0
    %1265 = vmatpush1.msra.mxu0 0.0
    %1266 = vmatprep.subr.mxu0 0.0
    %1267 = vmatpush1.msra.mxu0 0.0
    %1268 = vmatprep.subr.mxu0 0.0
    %1269 = vmatpush1.msra.mxu0 0.0
    %1270 = vmatprep.subr.mxu0 0.0
    %1271 = vmatpush1.msra.mxu0 0.0
    %1272 = vmatprep.subr.mxu0 0.0
    %1273 = vmatpush1.msra.mxu0 0.0
    %1274 = vmatprep.subr.mxu0 0.0
    %1275 = vmatpush1.msra.mxu0 0.0
    %1276 = vmatprep.subr.mxu0 0.0
    %1277 = vmatpush1.msra.mxu0 0.0
    %1278 = vmatprep.subr.mxu0 0.0
    %1279 = vmatpush1.msra.mxu0 0.0
    %1280 = vmatprep.subr.mxu0 0.0
    %1281 = vmatpush1.msra.mxu0 0.0
    %1282 = vmatprep.subr.mxu0 0.0
    %1283 = vmatpush1.msra.mxu0 0.0
    %1284 = vmatprep.subr.mxu0 0.0
    %1285 = vmatpush1.msra.mxu0 0.0
    %1286 = vmatprep.subr.mxu0 0.0
    %1287 = vmatpush1.msra.mxu0 %v1252
    %1288 = vmatprep.subr.mxu0 0.0
    %1289 = vmatpush2.msra.mxu0 0.0
    %1290 = vmatprep.subr.mxu0 0.0
    %1291 = vmatpush2.msra.mxu0 0.0
    %1292 = vmatprep.subr.mxu0 0.0
    %1293 = vmatpush2.msra.mxu0 0.0
    %1294 = vmatprep.subr.mxu0 0.0
    %1295 = vmatpush2.msra.mxu0 0.0
    %1296 = vmatprep.subr.mxu0 0.0
    %1297 = vmatpush2.msra.mxu0 0.0
    %1298 = vmatprep.subr.mxu0 0.0
    %1299 = vmatpush2.msra.mxu0 0.0
    %1300 = vmatprep.subr.mxu0 0.0
    %1301 = vmatpush2.msra.mxu0 0.0
    %1302 = vmatprep.subr.mxu0 0.0
    %1303 = vmatpush2.msra.mxu0 0.0
    %1304 = vmatprep.subr.mxu0 0.0
    %1305 = vmatpush2.msra.mxu0 0.0
    %1306 = vmatprep.subr.mxu0 0.0
    %1307 = vmatpush2.msra.mxu0 0.0
    %1308 = vmatprep.subr.mxu0 0.0
    %1309 = vmatpush2.msra.mxu0 0.0
    %1310 = vmatprep.subr.mxu0 0.0
    %1311 = vmatpush2.msra.mxu0 0.0
    %1312 = vmatprep.subr.mxu0 0.0
    %1313 = vmatpush2.msra.mxu0 0.0
    %1314 = vmatprep.subr.mxu0 0.0
    %1315 = vmatpush2.msra.mxu0 0.0
    %1316 = vmatprep.subr.mxu0 0.0
    %1317 = vmatpush2.msra.mxu0 0.0
    %1318 = vmatprep.subr.mxu0 0.0
    %1319 = vmatpush2.msra.mxu0 0.0
    %1320 = vmatprep.mubr.f32.mxu0 0.0
    %1321 = vmatmul.mubr.f32.gmra.mxu0 %v1254
    %v1322 = vpop.f32.mrf.mxu0
    %v1323 = vadd.f32 0.0, %v1322
    %v1324 = vpop.f32.mrf.mxu0
    %1325 = vdwg.mxu0
    %1328 = vrot.lane.b32.xlu0 %v1246, 16
    %v1329 = vpop.permute.xlu0 %1328
    %1330 = vrot.lane.b32.xlu0 %v1323, 16
    %v1331 = vpop.permute.xlu0 %1330
    %1334 = vst.msk [vmem:[#allocation3] sm:$0xff] %vm642, %v1329
    %1335 = vst.msk [vmem:[#allocation3 + $0x8] sm:$0xff] %vm642, %v1331
    %1336 = vrot.lane.b32.xlu0 %v850, 104
    %v1337 = vpop.permute.xlu0 %1336
    %1338 = vrot.lane.b32.xlu0 %v144, 40
    %v1339 = vpop.permute.xlu0 %1338
    %v1341 = vsel %vm155, %v1337, 0
    %1343 = vmatprep.subr.mxu0 0.0
    %1344 = vmatpush1.msra.mxu0 0.0
    %1345 = vmatprep.subr.mxu0 0.0
    %1346 = vmatpush1.msra.mxu0 0.0
    %1347 = vmatprep.subr.mxu0 0.0
    %1348 = vmatpush1.msra.mxu0 0.0
    %1349 = vmatprep.subr.mxu0 0.0
    %1350 = vmatpush1.msra.mxu0 0.0
    %1351 = vmatprep.subr.mxu0 0.0
    %1352 = vmatpush1.msra.mxu0 0.0
    %1353 = vmatprep.subr.mxu0 0.0
    %1354 = vmatpush1.msra.mxu0 0.0
    %1355 = vmatprep.subr.mxu0 0.0
    %1356 = vmatpush1.msra.mxu0 0.0
    %1357 = vmatprep.subr.mxu0 0.0
    %1358 = vmatpush1.msra.mxu0 0.0
    %1359 = vmatprep.subr.mxu0 0.0
    %1360 = vmatpush1.msra.mxu0 0.0
    %1361 = vmatprep.subr.mxu0 0.0
    %1362 = vmatpush1.msra.mxu0 0.0
    %1363 = vmatprep.subr.mxu0 0.0
    %1364 = vmatpush1.msra.mxu0 0.0
    %1365 = vmatprep.subr.mxu0 0.0
    %1366 = vmatpush1.msra.mxu0 0.0
    %1367 = vmatprep.subr.mxu0 0.0
    %1368 = vmatpush1.msra.mxu0 0.0
    %1369 = vmatprep.subr.mxu0 0.0
    %1370 = vmatpush1.msra.mxu0 0.0
    %1371 = vmatprep.subr.mxu0 0.0
    %1372 = vmatpush1.msra.mxu0 0.0
    %1373 = vmatprep.subr.mxu0 0.0
    %1374 = vmatpush1.msra.mxu0 %v1339
    %1375 = vmatprep.subr.mxu0 0.0
    %1376 = vmatpush2.msra.mxu0 0.0
    %1377 = vmatprep.subr.mxu0 0.0
    %1378 = vmatpush2.msra.mxu0 0.0
    %1379 = vmatprep.subr.mxu0 0.0
    %1380 = vmatpush2.msra.mxu0 0.0
    %1381 = vmatprep.subr.mxu0 0.0
    %1382 = vmatpush2.msra.mxu0 0.0
    %1383 = vmatprep.subr.mxu0 0.0
    %1384 = vmatpush2.msra.mxu0 0.0
    %1385 = vmatprep.subr.mxu0 0.0
    %1386 = vmatpush2.msra.mxu0 0.0
    %1387 = vmatprep.subr.mxu0 0.0
    %1388 = vmatpush2.msra.mxu0 0.0
    %1389 = vmatprep.subr.mxu0 0.0
    %1390 = vmatpush2.msra.mxu0 0.0
    %1391 = vmatprep.subr.mxu0 0.0
    %1392 = vmatpush2.msra.mxu0 0.0
    %1393 = vmatprep.subr.mxu0 0.0
    %1394 = vmatpush2.msra.mxu0 0.0
    %1395 = vmatprep.subr.mxu0 0.0
    %1396 = vmatpush2.msra.mxu0 0.0
    %1397 = vmatprep.subr.mxu0 0.0
    %1398 = vmatpush2.msra.mxu0 0.0
    %1399 = vmatprep.subr.mxu0 0.0
    %1400 = vmatpush2.msra.mxu0 0.0
    %1401 = vmatprep.subr.mxu0 0.0
    %1402 = vmatpush2.msra.mxu0 0.0
    %1403 = vmatprep.subr.mxu0 0.0
    %1404 = vmatpush2.msra.mxu0 0.0
    %1405 = vmatprep.subr.mxu0 0.0
    %1406 = vmatpush2.msra.mxu0 0.0
    %1407 = vmatprep.mubr.f32.mxu0 0.0
    %1408 = vmatmul.mubr.f32.gmra.mxu0 %v1341
    %v1409 = vpop.f32.mrf.mxu0
    %v1410 = vadd.f32 0.0, %v1409
    %v1411 = vpop.f32.mrf.mxu0
    %1412 = vdwg.mxu0
    %1413 = vrot.lane.b32.xlu0 %v851, 104
    %v1414 = vpop.permute.xlu0 %1413
    %1415 = vrot.lane.b32.xlu0 %v149, 40
    %v1416 = vpop.permute.xlu0 %1415
    %v1418 = vsel %vm155, %v1414, 0
    %1420 = vmatprep.subr.mxu0 0.0
    %1421 = vmatpush1.msra.mxu0 0.0
    %1422 = vmatprep.subr.mxu0 0.0
    %1423 = vmatpush1.msra.mxu0 0.0
    %1424 = vmatprep.subr.mxu0 0.0
    %1425 = vmatpush1.msra.mxu0 0.0
    %1426 = vmatprep.subr.mxu0 0.0
    %1427 = vmatpush1.msra.mxu0 0.0
    %1428 = vmatprep.subr.mxu0 0.0
    %1429 = vmatpush1.msra.mxu0 0.0
    %1430 = vmatprep.subr.mxu0 0.0
    %1431 = vmatpush1.msra.mxu0 0.0
    %1432 = vmatprep.subr.mxu0 0.0
    %1433 = vmatpush1.msra.mxu0 0.0
    %1434 = vmatprep.subr.mxu0 0.0
    %1435 = vmatpush1.msra.mxu0 0.0
    %1436 = vmatprep.subr.mxu0 0.0
    %1437 = vmatpush1.msra.mxu0 0.0
    %1438 = vmatprep.subr.mxu0 0.0
    %1439 = vmatpush1.msra.mxu0 0.0
    %1440 = vmatprep.subr.mxu0 0.0
    %1441 = vmatpush1.msra.mxu0 0.0
    %1442 = vmatprep.subr.mxu0 0.0
    %1443 = vmatpush1.msra.mxu0 0.0
    %1444 = vmatprep.subr.mxu0 0.0
    %1445 = vmatpush1.msra.mxu0 0.0
    %1446 = vmatprep.subr.mxu0 0.0
    %1447 = vmatpush1.msra.mxu0 0.0
    %1448 = vmatprep.subr.mxu0 0.0
    %1449 = vmatpush1.msra.mxu0 0.0
    %1450 = vmatprep.subr.mxu0 0.0
    %1451 = vmatpush1.msra.mxu0 %v1416
    %1452 = vmatprep.subr.mxu0 0.0
    %1453 = vmatpush2.msra.mxu0 0.0
    %1454 = vmatprep.subr.mxu0 0.0
    %1455 = vmatpush2.msra.mxu0 0.0
    %1456 = vmatprep.subr.mxu0 0.0
    %1457 = vmatpush2.msra.mxu0 0.0
    %1458 = vmatprep.subr.mxu0 0.0
    %1459 = vmatpush2.msra.mxu0 0.0
    %1460 = vmatprep.subr.mxu0 0.0
    %1461 = vmatpush2.msra.mxu0 0.0
    %1462 = vmatprep.subr.mxu0 0.0
    %1463 = vmatpush2.msra.mxu0 0.0
    %1464 = vmatprep.subr.mxu0 0.0
    %1465 = vmatpush2.msra.mxu0 0.0
    %1466 = vmatprep.subr.mxu0 0.0
    %1467 = vmatpush2.msra.mxu0 0.0
    %1468 = vmatprep.subr.mxu0 0.0
    %1469 = vmatpush2.msra.mxu0 0.0
    %1470 = vmatprep.subr.mxu0 0.0
    %1471 = vmatpush2.msra.mxu0 0.0
    %1472 = vmatprep.subr.mxu0 0.0
    %1473 = vmatpush2.msra.mxu0 0.0
    %1474 = vmatprep.subr.mxu0 0.0
    %1475 = vmatpush2.msra.mxu0 0.0
    %1476 = vmatprep.subr.mxu0 0.0
    %1477 = vmatpush2.msra.mxu0 0.0
    %1478 = vmatprep.subr.mxu0 0.0
    %1479 = vmatpush2.msra.mxu0 0.0
    %1480 = vmatprep.subr.mxu0 0.0
    %1481 = vmatpush2.msra.mxu0 0.0
    %1482 = vmatprep.subr.mxu0 0.0
    %1483 = vmatpush2.msra.mxu0 0.0
    %1484 = vmatprep.mubr.f32.mxu0 0.0
    %1485 = vmatmul.mubr.f32.gmra.mxu0 %v1418
    %v1486 = vpop.f32.mrf.mxu0
    %v1487 = vadd.f32 0.0, %v1486
    %v1488 = vpop.f32.mrf.mxu0
    %1489 = vdwg.mxu0
    %1492 = vrot.lane.b32.xlu0 %v1410, 24
    %v1493 = vpop.permute.xlu0 %1492
    %1494 = vrot.lane.b32.xlu0 %v1487, 24
    %v1495 = vpop.permute.xlu0 %1494
    %1498 = vst.msk [vmem:[#allocation3] sm:$0xff] %vm809, %v1493
    %1499 = vst.msk [vmem:[#allocation3 + $0x8] sm:$0xff] %vm809, %v1495
    %v1500 = vld [vmem:[#allocation3] sm:$0xff]
    %v1501 = vld [vmem:[#allocation3 + $0x8] sm:$0xff]
    %v1502 = vld [vmem:[%s3] sm:$0xff]
    %v1503 = vld [vmem:[%s3 + $0x8] sm:$0xff]
    %v1504 = vld [vmem:[%s3 + $0x10] sm:$0xff]
    %v1505 = vld [vmem:[%s3 + $0x18] sm:$0xff]
    %v1506 = vld [vmem:[%s4] sm:$0x1]
    %v1508 = vlaneseq
    %v1509 = vshrl.u32 %v1508, 7
    %v1510 = vsub.s32 0, %v1509
    %v1511 = vrot.slane %v1506, %v1510
    %v1514 = vsel %vm38, %v1500, 0
    %v1517 = vsel %vm38, %v1501, 0
    %1519 = vmatprep.subr.mxu0 0.0
    %1520 = vmatpush1.msra.mxu0 0.0
    %1521 = vmatprep.subr.mxu0 0.0
    %1522 = vmatpush1.msra.mxu0 0.0
    %1523 = vmatprep.subr.mxu0 0.0
    %1524 = vmatpush1.msra.mxu0 0.0
    %1525 = vmatprep.subr.mxu0 0.0
    %1526 = vmatpush1.msra.mxu0 0.0
    %1527 = vmatprep.subr.mxu0 0.0
    %1528 = vmatpush1.msra.mxu0 0.0
    %1529 = vmatprep.subr.mxu0 0.0
    %1530 = vmatpush1.msra.mxu0 0.0
    %1531 = vmatprep.subr.mxu0 0.0
    %1532 = vmatpush1.msra.mxu0 0.0
    %1533 = vmatprep.subr.mxu0 0.0
    %1534 = vmatpush1.msra.mxu0 0.0
    %1535 = vmatprep.subr.mxu0 0.0
    %1536 = vmatpush1.msra.mxu0 0.0
    %1537 = vmatprep.subr.mxu0 0.0
    %1538 = vmatpush1.msra.mxu0 0.0
    %1539 = vmatprep.subr.mxu0 0.0
    %1540 = vmatpush1.msra.mxu0 0.0
    %1541 = vmatprep.subr.mxu0 0.0
    %1542 = vmatpush1.msra.mxu0 0.0
    %1543 = vmatprep.subr.mxu0 0.0
    %1544 = vmatpush1.msra.mxu0 %v1505
    %1545 = vmatprep.subr.mxu0 0.0
    %1546 = vmatpush1.msra.mxu0 %v1504
    %1547 = vmatprep.subr.mxu0 0.0
    %1548 = vmatpush1.msra.mxu0 %v1503
    %1549 = vmatprep.subr.mxu0 0.0
    %1550 = vmatpush1.msra.mxu0 %v1502
    %1551 = vmatprep.subr.mxu0 0.0
    %1552 = vmatpush2.msra.mxu0 0.0
    %1553 = vmatprep.subr.mxu0 0.0
    %1554 = vmatpush2.msra.mxu0 0.0
    %1555 = vmatprep.subr.mxu0 0.0
    %1556 = vmatpush2.msra.mxu0 0.0
    %1557 = vmatprep.subr.mxu0 0.0
    %1558 = vmatpush2.msra.mxu0 0.0
    %1559 = vmatprep.subr.mxu0 0.0
    %1560 = vmatpush2.msra.mxu0 0.0
    %1561 = vmatprep.subr.mxu0 0.0
    %1562 = vmatpush2.msra.mxu0 0.0
    %1563 = vmatprep.subr.mxu0 0.0
    %1564 = vmatpush2.msra.mxu0 0.0
    %1565 = vmatprep.subr.mxu0 0.0
    %1566 = vmatpush2.msra.mxu0 0.0
    %1567 = vmatprep.subr.mxu0 0.0
    %1568 = vmatpush2.msra.mxu0 0.0
    %1569 = vmatprep.subr.mxu0 0.0
    %1570 = vmatpush2.msra.mxu0 0.0
    %1571 = vmatprep.subr.mxu0 0.0
    %1572 = vmatpush2.msra.mxu0 0.0
    %1573 = vmatprep.subr.mxu0 0.0
    %1574 = vmatpush2.msra.mxu0 0.0
    %1575 = vmatprep.subr.mxu0 0.0
    %1576 = vmatpush2.msra.mxu0 0.0
    %1577 = vmatprep.subr.mxu0 0.0
    %1578 = vmatpush2.msra.mxu0 0.0
    %1579 = vmatprep.subr.mxu0 0.0
    %1580 = vmatpush2.msra.mxu0 0.0
    %1581 = vmatprep.subr.mxu0 0.0
    %1582 = vmatpush2.msra.mxu0 0.0
    %1583 = vmatprep.mubr.f32.mxu0 0.0
    %1584 = vmatmul.mubr.f32.gmra.mxu0 %v1514
    %v1585 = vpop.f32.mrf.mxu0
    %v1586 = vadd.f32 %v1511, %v1585
    %v1587 = vpop.f32.mrf.mxu0
    %1588 = vmatprep.mubr.f32.mxu0 0.0
    %1589 = vmatmul.mubr.f32.gmra.mxu0 %v1517
    %v1590 = vpop.f32.mrf.mxu0
    %v1591 = vadd.f32 %v1511, %v1590
    %v1592 = vpop.f32.mrf.mxu0
    %1593 = vdwg.mxu0
    %1594 = vst.msk [vmem:[#allocation4] sm:$0xff] %vm38, %v1586
    %1595 = vst.msk [vmem:[#allocation4 + $0x8] sm:$0xff] %vm38, %v1591
    // Predicated region
    $region22: #{tpu_custom_call.1} parent=1 // pred_check
      _
    $region23: #{tpu_custom_call.1} parent=1 // pred_check_branch
      %1597 = sbr.rel (0) target = $region25
    $region24: #{tpu_custom_call.1} parent=1 // pred_region
      %s1599 = ssub.s32 256, 256
      %1600 = vsyncadd [#allocation5], %s1599
      %s1601 = sshll.u32 [#allocation4], 4
      %s1602 = int_to_ptr.vmem [resolvable:$true] %s1601
      %1607 = dma.vmem_to_hbm [thread:$0]  %s1602, 256, %s5, [#allocation5], 128, 128, 8
    $region25: #{tpu_custom_call.1} parent=1 // pred_fallthru
      _
    // Predicated region
    $region26: #{tpu_custom_call.1} parent=1 // pred_check
      _
    $region27: #{tpu_custom_call.1} parent=1 // pred_check_branch
      %1609 = sbr.rel (0) target = $region29
    $region28: #{tpu_custom_call.1} parent=1 // pred_region
      %1610 = dma.done [#allocation5], 256
    $region29: #{tpu_custom_call.1} parent=1 // pred_fallthru
      _
    %1611 = vsyncpa [#allocation5], 1

</llo_original>
